<compile_context>
chip_gen: v5e
topology: v5e:2x2
jax: 0.10.0
libtpu: 0.0.40
codegen_flags: <defaults>
</compile_context>

<pallas_src>
import jax
import jax.numpy as jnp
from jax import lax
from jax.experimental import pallas as pl
from jax.experimental.pallas import tpu as pltpu

B, H, W = 2, 16, 16
C_IN = 4                 # BEV pillar feature channels per frame
CIN2 = 2 * C_IN          # concatenated (frame_a, frame_b) features
HIDDEN = 32              # RAFT update hidden size
C_OUT = 7                # [static_flow(2), dynamic_flow_residual(2), class_logits(3)]
C_PAD = 8                # C_OUT padded to the 8-sublane vreg tile
NUM_ITERS = 2            # slim_cfg.model.num_iters
HW = H * W               # pixels per BEV map
N_PIX = B * H * W        # pixels per direction (lane axis per grid step)
R = 2 * N_PIX            # fw + bw pixels (full output lane axis)
TWO_B = 2 * B            # (direction, batch) segments
MIN_POINTS = 32.0        # filled-pillar count below which not_enough_points is set


# ---------------- fused RAFT-iterations + HeadDecoder kernel (per direction) ----------------

def _slim_fused_kernel(thr_ref, x_ref, dbg_ref, w1_ref, w1p_ref, b1_ref,
                       w2_ref, b2_ref, out_ref):
    thr = thr_ref[0]                                            # SMEM scalar

    # filled_pillar_mask = (bev_net_input_dbg > 0.5), pixels on the lane axis.
    filled = (dbg_ref[...] > 0.5).astype(jnp.float32)           # (1, N_PIX)

    # Iteration-invariant hidden pre-activation.  Transposed contraction against
    # the natural (N_PIX, CIN2) feature layout (no explicit transpose anywhere);
    # the fw/bw frame swap is baked into the per-direction w1 slab picked by the
    # BlockSpec index_map.
    dn = (((1,), (1,)), ((), ()))
    ff = lax.dot_general(w1_ref[...], x_ref[...], dn,
                         preferred_element_type=jnp.float32) + b1_ref[...]    # (HIDDEN, N_PIX)

    w1p = w1p_ref[...]                                          # (HIDDEN, C_PAD), pad col = 0
    w2 = w2_ref[...]                                            # (C_PAD, HIDDEN), pad row = 0
    b2 = b2_ref[...]                                            # (C_PAD, 1),      pad row = 0

    prev = jnp.zeros((C_PAD, N_PIX), jnp.float32)               # RAFT state stays in vregs
    for it in range(NUM_ITERS):
        h = jnp.tanh(ff + jnp.dot(w1p, prev, preferred_element_type=jnp.float32))
        net = jnp.dot(w2, h, preferred_element_type=jnp.float32) + b2 + prev  # (C_PAD, N_PIX)
        prev = net                                              # pad row stays exactly 0

        # ---- HeadDecoder epilogue, batched over multi-row slabs ----
        static_flow = net[0:2, :]                               # (2, N_PIX)
        dyn_flow = static_flow + net[2:4, :]                    # dynamic = static + residual
        logits = net[4:7, :]                                    # (3, N_PIX) class logits
        m = jnp.max(logits, axis=0, keepdims=True)              # (1, N_PIX)
        e = jnp.exp(logits - m)                                 # (3, N_PIX), one EUP slab
        denom = e[0:1, :] + e[1:2, :] + e[2:3, :]
        dynamicness = e[1:2, :] * pl.reciprocal(denom, approx=True)

        is_dyn = (dynamicness >= thr).astype(jnp.float32)       # (1, N_PIX)
        agg = (is_dyn * dyn_flow + (1.0 - is_dyn) * static_flow) * filled     # (2, N_PIX)

        slab = jnp.concatenate(
            [agg, dynamicness * filled,
             jnp.zeros((C_PAD - 3, N_PIX), jnp.float32)], axis=0)             # (C_PAD, N_PIX)
        out_ref[it] = slab        # single unmasked full-tile store per iteration


def _build_slim_call():
    grid_spec = pltpu.PrefetchScalarGridSpec(
        num_scalar_prefetch=0,
        grid=(2,),                # one step per direction (fw / bw)
        in_specs=[
            pl.BlockSpec(memory_space=pltpu.MemorySpace.SMEM),          # threshold (1,)
            pl.BlockSpec((N_PIX, CIN2), lambda d: (0, 0)),              # features (natural layout)
            pl.BlockSpec((None, 1, N_PIX), lambda d: (d, 0, 0)),        # per-direction dbg row
            pl.BlockSpec((None, HIDDEN, CIN2), lambda d: (d, 0, 0)),    # per-direction w1 slab
            pl.BlockSpec((HIDDEN, C_PAD), lambda d: (0, 0)),            # w1pT (padded)
            pl.BlockSpec((HIDDEN, 1), lambda d: (0, 0)),                # b1
            pl.BlockSpec((C_PAD, HIDDEN), lambda d: (0, 0)),            # w2T (padded)
            pl.BlockSpec((C_PAD, 1), lambda d: (0, 0)),                 # b2 (padded)
        ],
        out_specs=pl.BlockSpec((NUM_ITERS, C_PAD, N_PIX), lambda d: (0, 0, d)),
    )
    return pl.pallas_call(
        _slim_fused_kernel,
        out_shape=jax.ShapeDtypeStruct((NUM_ITERS, C_PAD, R), jnp.float32),
        grid_spec=grid_spec,
        compiler_params=pltpu.CompilerParams(dimension_semantics=("parallel",)),
    )


_SLIM_CALL = _build_slim_call()


# ---------------- jitted wrapper (layout plumbing + pillar counts in XLA) ----------------

def _slim_forward(params, feat_t0, feat_t1, bev_dbg_t0, bev_dbg_t1):
    fa = feat_t0.reshape(N_PIX, C_IN)
    fb = feat_t1.reshape(N_PIX, C_IN)
    x = jnp.concatenate([fa, fb], axis=1)                           # (N_PIX, CIN2)
    dbg = jnp.stack([bev_dbg_t0.reshape(1, N_PIX),
                     bev_dbg_t1.reshape(1, N_PIX)], axis=0)         # (2, 1, N_PIX)

    out = _SLIM_CALL(params["thr"], x, dbg,
                     params["w1T"], params["w1pT"], params["b1"],
                     params["w2T"], params["b2"])                   # (iters, C_PAD, R)

    # rows: [agg_x, agg_y, dynamicness, pad...] ; lanes: [fw pixels | bw pixels]
    flow = out[:, 0:2, :].reshape(NUM_ITERS, 2, 2, B, H, W)
    flow_fw = jnp.transpose(flow[:, :, 0], (0, 2, 3, 4, 1))         # (iters, B, H, W, 2)
    flow_bw = jnp.transpose(flow[:, :, 1], (0, 2, 3, 4, 1))
    dyn = out[:, 2, :].reshape(NUM_ITERS, 2, B, H, W)
    dyn_fw, dyn_bw = dyn[:, 0], dyn[:, 1]

    # filled-pillar counts depend only on the input occupancy map -> computed here.
    filled = (jnp.stack([bev_dbg_t0, bev_dbg_t1], axis=0) > 0.5)    # (2, B, H, W)
    counts = jnp.sum(filled.reshape(TWO_B, HW).astype(jnp.float32), axis=1)
    nep = counts < MIN_POINTS                                       # (2B,): [fw batches, bw batches]
    # filled mask is identical across iterations, so the per-iteration accumulation
    # of the original module reduces to NUM_ITERS * sum(per-batch flags).
    nep_total = jnp.int32(NUM_ITERS) * jnp.sum(nep.astype(jnp.int32))
    return flow_fw, flow_bw, dyn_fw, dyn_bw, nep, nep_total


# ---------------- SLIM module (glue in plain Python) ----------------

class SLIMPallas:
    def __init__(self, key):
        k1, k2, k3, k4 = jax.random.split(key, 4)
        w1a = 0.1 * jax.random.normal(k1, (HIDDEN, C_IN), jnp.float32)   # first-frame half
        w1b = 0.1 * jax.random.normal(k2, (HIDDEN, C_IN), jnp.float32)   # second-frame half
        # per-direction weight slabs: fw sees [w1a | w1b], bw sees [w1b | w1a]
        w1T = jnp.stack([jnp.concatenate([w1a, w1b], axis=1),
                         jnp.concatenate([w1b, w1a], axis=1)], axis=0)   # (2, HIDDEN, CIN2)
        w1p = 0.1 * jax.random.normal(k3, (HIDDEN, C_OUT), jnp.float32)
        w2 = 0.1 * jax.random.normal(k4, (C_OUT, HIDDEN), jnp.float32)
        self.params = {
            "w1T": w1T,
            "w1pT": jnp.pad(w1p, ((0, 0), (0, C_PAD - C_OUT))),           # (HIDDEN, 8), pad col 0
            "b1": jnp.zeros((HIDDEN, 1), jnp.float32),
            "w2T": jnp.pad(w2, ((0, C_PAD - C_OUT), (0, 0))),             # (8, HIDDEN), pad row 0
            "b2": jnp.zeros((C_PAD, 1), jnp.float32),
            # MovingAverageThreshold.value(): deterministic synthetic scalar.
            "thr": jnp.full((1,), 0.5, jnp.float32),
        }
        self._forward = jax.jit(_slim_forward)

    def forward(self, feat_t0, feat_t1, bev_dbg_t0, bev_dbg_t1):
        flow_fw, flow_bw, dyn_fw, dyn_bw, nep, nep_total = self._forward(
            self.params, feat_t0, feat_t1, bev_dbg_t0, bev_dbg_t1)
        nep_fw, nep_bw = nep[:B], nep[B:]
        predictions_fw, predictions_bw = [], []
        for it in range(NUM_ITERS):
            predictions_fw.append({
                "aggregated_flow_bev": flow_fw[it],
                "dynamicness_bev": dyn_fw[it],
                "not_enough_points": nep_fw,
            })
            predictions_bw.append({
                "aggregated_flow_bev": flow_bw[it],
                "dynamicness_bev": dyn_bw[it],
                "not_enough_points": nep_bw,
            })
        return predictions_fw, predictions_bw, nep_total


if __name__ == "__main__":
    key = jax.random.PRNGKey(0)
    kf0, kf1, kd0, kd1 = jax.random.split(key, 4)
    feat_t0 = jax.random.normal(kf0, (B, H, W, C_IN), jnp.float32)
    feat_t1 = jax.random.normal(kf1, (B, H, W, C_IN), jnp.float32)
    # proxy for aux_outputs['t*']['bev_net_input_dbg'] (pillar occupancy map)
    bev_dbg_t0 = jax.random.uniform(kd0, (B, H, W), jnp.float32)
    bev_dbg_t1 = jax.random.uniform(kd1, (B, H, W), jnp.float32)

    model = SLIMPallas(jax.random.PRNGKey(42))
    preds_fw, preds_bw, nep = model.forward(feat_t0, feat_t1, bev_dbg_t0, bev_dbg_t1)

    jax.block_until_ready(preds_fw[-1]["aggregated_flow_bev"])
    jax.block_until_ready(preds_bw[-1]["dynamicness_bev"])
    jax.block_until_ready(nep)
    print("KERNEL_OK")
</pallas_src>

<mosaic_0001>
module attributes {stable_mosaic.version = 11 : i64} {
  func.func @_slim_fused_kernel(%arg0: i32, %arg1: memref<1xf32, #tpu.memory_space<smem>>, %arg2: memref<512x8xf32, #tpu.memory_space<vmem>>, %arg3: memref<1x1x512xf32, #tpu.memory_space<vmem>>, %arg4: memref<1x32x8xf32, #tpu.memory_space<vmem>>, %arg5: memref<32x8xf32, #tpu.memory_space<vmem>>, %arg6: memref<32x1xf32, #tpu.memory_space<vmem>>, %arg7: memref<8x32xf32, #tpu.memory_space<vmem>>, %arg8: memref<8x1xf32, #tpu.memory_space<vmem>>, %arg9: memref<2x8x512xf32, #tpu.memory_space<vmem>>) attributes {dimension_semantics = [#tpu.dimension_semantics<parallel>], iteration_bounds = array<i64: 2>, scalar_prefetch = 0 : i64, scratch_operands = 0 : i64, tpu.core_type = #tpu.core_type<tc>, window_params = [{transform_indices = @transform_0, window_bounds = array<i64: 1>}, {pipeline_mode = #tpu.pipeline_mode<synchronous>, transform_indices = @transform_1, window_bounds = array<i64: 512, 8>}, {transform_indices = @transform_2, window_bounds = array<i64: 1, 1, 512>}, {transform_indices = @transform_3, window_bounds = array<i64: 1, 32, 8>}, {pipeline_mode = #tpu.pipeline_mode<synchronous>, transform_indices = @transform_4, window_bounds = array<i64: 32, 8>}, {pipeline_mode = #tpu.pipeline_mode<synchronous>, transform_indices = @transform_5, window_bounds = array<i64: 32, 1>}, {pipeline_mode = #tpu.pipeline_mode<synchronous>, transform_indices = @transform_6, window_bounds = array<i64: 8, 32>}, {pipeline_mode = #tpu.pipeline_mode<synchronous>, transform_indices = @transform_7, window_bounds = array<i64: 8, 1>}, {transform_indices = @transform_8, window_bounds = array<i64: 2, 8, 512>}]} {
    %c0 = arith.constant 0 : index
    %0 = memref.load %arg1[%c0] : memref<1xf32, #tpu.memory_space<smem>>
    %c0_0 = arith.constant 0 : index
    %c0_1 = arith.constant 0 : index
    %c0_2 = arith.constant 0 : index
    %1 = vector.load %arg3[%c0_0, %c0_1, %c0_2] : memref<1x1x512xf32, #tpu.memory_space<vmem>>, vector<1x1x512xf32>
    %2 = vector.shape_cast %1 : vector<1x1x512xf32> to vector<1x512xf32>
    %cst = arith.constant 5.000000e-01 : f32
    %3 = vector.broadcast %cst : f32 to vector<1x512xf32>
    %4 = arith.cmpf ogt, %2, %3 : vector<1x512xf32>
    %5 = arith.extui %4 : vector<1x512xi1> to vector<1x512xi32>
    %6 = arith.sitofp %5 : vector<1x512xi32> to vector<1x512xf32>
    %c0_3 = arith.constant 0 : index
    %c0_4 = arith.constant 0 : index
    %c0_5 = arith.constant 0 : index
    %7 = vector.load %arg4[%c0_3, %c0_4, %c0_5] : memref<1x32x8xf32, #tpu.memory_space<vmem>>, vector<1x32x8xf32>
    %8 = vector.shape_cast %7 : vector<1x32x8xf32> to vector<32x8xf32>
    %c0_6 = arith.constant 0 : index
    %c0_7 = arith.constant 0 : index
    %9 = vector.load %arg2[%c0_6, %c0_7] : memref<512x8xf32, #tpu.memory_space<vmem>>, vector<512x8xf32>
    %cst_8 = arith.constant dense<0.000000e+00> : vector<32x512xf32>
    %10 = tpu.matmul %8, %9, %cst_8 {dimension_numbers = #tpu.dot_dimension_numbers<[1], [1], [0], [0], [0, 0, 1, 0], [], []>} : vector<32x8xf32>, vector<512x8xf32>, vector<32x512xf32> -> vector<32x512xf32>
    %c0_9 = arith.constant 0 : index
    %c0_10 = arith.constant 0 : index
    %11 = vector.load %arg6[%c0_9, %c0_10] : memref<32x1xf32, #tpu.memory_space<vmem>>, vector<32x1xf32>
    %12 = vector.broadcast %11 : vector<32x1xf32> to vector<32x512xf32>
    %13 = arith.addf %10, %12 : vector<32x512xf32>
    %c0_11 = arith.constant 0 : index
    %c0_12 = arith.constant 0 : index
    %14 = vector.load %arg5[%c0_11, %c0_12] : memref<32x8xf32, #tpu.memory_space<vmem>>, vector<32x8xf32>
    %c0_13 = arith.constant 0 : index
    %c0_14 = arith.constant 0 : index
    %15 = vector.load %arg7[%c0_13, %c0_14] : memref<8x32xf32, #tpu.memory_space<vmem>>, vector<8x32xf32>
    %c0_15 = arith.constant 0 : index
    %c0_16 = arith.constant 0 : index
    %16 = vector.load %arg8[%c0_15, %c0_16] : memref<8x1xf32, #tpu.memory_space<vmem>>, vector<8x1xf32>
    %cst_17 = arith.constant 0.000000e+00 : f32
    %17 = vector.broadcast %cst_17 : f32 to vector<8x512xf32>
    %cst_18 = arith.constant dense<0.000000e+00> : vector<32x512xf32>
    %18 = tpu.matmul %14, %17, %cst_18 {dimension_numbers = #tpu.dot_dimension_numbers<[1], [0], [0], [1], [0, 0, 1, 1], [], []>} : vector<32x8xf32>, vector<8x512xf32>, vector<32x512xf32> -> vector<32x512xf32>
    %19 = arith.addf %13, %18 : vector<32x512xf32>
    %20 = math.tanh %19 : vector<32x512xf32>
    %cst_19 = arith.constant dense<0.000000e+00> : vector<8x512xf32>
    %21 = tpu.matmul %15, %20, %cst_19 {dimension_numbers = #tpu.dot_dimension_numbers<[1], [0], [0], [1], [0, 0, 1, 1], [], []>} : vector<8x32xf32>, vector<32x512xf32>, vector<8x512xf32> -> vector<8x512xf32>
    %22 = vector.broadcast %16 : vector<8x1xf32> to vector<8x512xf32>
    %23 = arith.addf %21, %22 : vector<8x512xf32>
    %24 = arith.addf %23, %17 : vector<8x512xf32>
    %25 = vector.extract_strided_slice %24 {offsets = [0, 0], sizes = [2, 512], strides = [1, 1]} : vector<8x512xf32> to vector<2x512xf32>
    %26 = vector.extract_strided_slice %24 {offsets = [2, 0], sizes = [2, 512], strides = [1, 1]} : vector<8x512xf32> to vector<2x512xf32>
    %27 = arith.addf %25, %26 : vector<2x512xf32>
    %28 = vector.extract_strided_slice %24 {offsets = [4, 0], sizes = [3, 512], strides = [1, 1]} : vector<8x512xf32> to vector<3x512xf32>
    %cst_20 = arith.constant dense<0xFF800000> : vector<512xf32>
    %29 = vector.multi_reduction <maximumf>, %28, %cst_20 [0] : vector<3x512xf32> to vector<512xf32>
    %30 = vector.shape_cast %29 : vector<512xf32> to vector<1x512xf32>
    %31 = vector.broadcast %30 : vector<1x512xf32> to vector<3x512xf32>
    %32 = arith.subf %28, %31 : vector<3x512xf32>
    %33 = math.exp %32 : vector<3x512xf32>
    %34 = vector.extract_strided_slice %33 {offsets = [0, 0], sizes = [1, 512], strides = [1, 1]} : vector<3x512xf32> to vector<1x512xf32>
    %35 = vector.extract_strided_slice %33 {offsets = [1, 0], sizes = [1, 512], strides = [1, 1]} : vector<3x512xf32> to vector<1x512xf32>
    %36 = arith.addf %34, %35 : vector<1x512xf32>
    %37 = vector.extract_strided_slice %33 {offsets = [2, 0], sizes = [1, 512], strides = [1, 1]} : vector<3x512xf32> to vector<1x512xf32>
    %38 = arith.addf %36, %37 : vector<1x512xf32>
    %39 = vector.extract_strided_slice %33 {offsets = [1, 0], sizes = [1, 512], strides = [1, 1]} : vector<3x512xf32> to vector<1x512xf32>
    %40 = tpu.reciprocal %38 {approx = true} : vector<1x512xf32> -> vector<1x512xf32>
    %41 = arith.mulf %39, %40 : vector<1x512xf32>
    %42 = vector.broadcast %0 : f32 to vector<1x512xf32>
    %43 = arith.cmpf oge, %41, %42 : vector<1x512xf32>
    %44 = arith.extui %43 : vector<1x512xi1> to vector<1x512xi32>
    %45 = arith.sitofp %44 : vector<1x512xi32> to vector<1x512xf32>
    %46 = vector.broadcast %45 : vector<1x512xf32> to vector<2x512xf32>
    %47 = arith.mulf %46, %27 : vector<2x512xf32>
    %cst_21 = arith.constant 1.000000e+00 : f32
    %48 = vector.broadcast %cst_21 : f32 to vector<1x512xf32>
    %49 = arith.subf %48, %45 : vector<1x512xf32>
    %50 = vector.broadcast %49 : vector<1x512xf32> to vector<2x512xf32>
    %51 = arith.mulf %50, %25 : vector<2x512xf32>
    %52 = arith.addf %47, %51 : vector<2x512xf32>
    %53 = vector.broadcast %6 : vector<1x512xf32> to vector<2x512xf32>
    %54 = arith.mulf %52, %53 : vector<2x512xf32>
    %55 = arith.mulf %41, %6 : vector<1x512xf32>
    %cst_22 = arith.constant 0.000000e+00 : f32
    %56 = vector.broadcast %cst_22 : f32 to vector<5x512xf32>
    %57 = tpu.concatenate %54, %55, %56 in 0 : vector<2x512xf32>, vector<1x512xf32>, vector<5x512xf32> -> vector<8x512xf32>
    %c0_23 = arith.constant 0 : index
    %c0_24 = arith.constant 0 : index
    %c0_25 = arith.constant 0 : index
    %58 = vector.load %arg9[%c0_23, %c0_24, %c0_25] : memref<2x8x512xf32, #tpu.memory_space<vmem>>, vector<1x8x512xf32>
    %59 = vector.shape_cast %58 : vector<1x8x512xf32> to vector<8x512xf32>
    %60 = vector.shape_cast %57 : vector<8x512xf32> to vector<1x8x512xf32>
    tpu.vector_store %arg9[%c0_23, %c0_24, %c0_25], %60 {strides = array<i32>} : memref<2x8x512xf32, #tpu.memory_space<vmem>>, vector<1x8x512xf32>,
    %cst_26 = arith.constant dense<0.000000e+00> : vector<32x512xf32>
    %61 = tpu.matmul %14, %24, %cst_26 {dimension_numbers = #tpu.dot_dimension_numbers<[1], [0], [0], [1], [0, 0, 1, 1], [], []>} : vector<32x8xf32>, vector<8x512xf32>, vector<32x512xf32> -> vector<32x512xf32>
    %62 = arith.addf %13, %61 : vector<32x512xf32>
    %63 = math.tanh %62 : vector<32x512xf32>
    %cst_27 = arith.constant dense<0.000000e+00> : vector<8x512xf32>
    %64 = tpu.matmul %15, %63, %cst_27 {dimension_numbers = #tpu.dot_dimension_numbers<[1], [0], [0], [1], [0, 0, 1, 1], [], []>} : vector<8x32xf32>, vector<32x512xf32>, vector<8x512xf32> -> vector<8x512xf32>
    %65 = vector.broadcast %16 : vector<8x1xf32> to vector<8x512xf32>
    %66 = arith.addf %64, %65 : vector<8x512xf32>
    %67 = arith.addf %66, %24 : vector<8x512xf32>
    %68 = vector.extract_strided_slice %67 {offsets = [0, 0], sizes = [2, 512], strides = [1, 1]} : vector<8x512xf32> to vector<2x512xf32>
    %69 = vector.extract_strided_slice %67 {offsets = [2, 0], sizes = [2, 512], strides = [1, 1]} : vector<8x512xf32> to vector<2x512xf32>
    %70 = arith.addf %68, %69 : vector<2x512xf32>
    %71 = vector.extract_strided_slice %67 {offsets = [4, 0], sizes = [3, 512], strides = [1, 1]} : vector<8x512xf32> to vector<3x512xf32>
    %cst_28 = arith.constant dense<0xFF800000> : vector<512xf32>
    %72 = vector.multi_reduction <maximumf>, %71, %cst_28 [0] : vector<3x512xf32> to vector<512xf32>
    %73 = vector.shape_cast %72 : vector<512xf32> to vector<1x512xf32>
    %74 = vector.broadcast %73 : vector<1x512xf32> to vector<3x512xf32>
    %75 = arith.subf %71, %74 : vector<3x512xf32>
    %76 = math.exp %75 : vector<3x512xf32>
    %77 = vector.extract_strided_slice %76 {offsets = [0, 0], sizes = [1, 512], strides = [1, 1]} : vector<3x512xf32> to vector<1x512xf32>
    %78 = vector.extract_strided_slice %76 {offsets = [1, 0], sizes = [1, 512], strides = [1, 1]} : vector<3x512xf32> to vector<1x512xf32>
    %79 = arith.addf %77, %78 : vector<1x512xf32>
    %80 = vector.extract_strided_slice %76 {offsets = [2, 0], sizes = [1, 512], strides = [1, 1]} : vector<3x512xf32> to vector<1x512xf32>
    %81 = arith.addf %79, %80 : vector<1x512xf32>
    %82 = vector.extract_strided_slice %76 {offsets = [1, 0], sizes = [1, 512], strides = [1, 1]} : vector<3x512xf32> to vector<1x512xf32>
    %83 = tpu.reciprocal %81 {approx = true} : vector<1x512xf32> -> vector<1x512xf32>
    %84 = arith.mulf %82, %83 : vector<1x512xf32>
    %85 = vector.broadcast %0 : f32 to vector<1x512xf32>
    %86 = arith.cmpf oge, %84, %85 : vector<1x512xf32>
    %87 = arith.extui %86 : vector<1x512xi1> to vector<1x512xi32>
    %88 = arith.sitofp %87 : vector<1x512xi32> to vector<1x512xf32>
    %89 = vector.broadcast %88 : vector<1x512xf32> to vector<2x512xf32>
    %90 = arith.mulf %89, %70 : vector<2x512xf32>
    %cst_29 = arith.constant 1.000000e+00 : f32
    %91 = vector.broadcast %cst_29 : f32 to vector<1x512xf32>
    %92 = arith.subf %91, %88 : vector<1x512xf32>
    %93 = vector.broadcast %92 : vector<1x512xf32> to vector<2x512xf32>
    %94 = arith.mulf %93, %68 : vector<2x512xf32>
    %95 = arith.addf %90, %94 : vector<2x512xf32>
    %96 = vector.broadcast %6 : vector<1x512xf32> to vector<2x512xf32>
    %97 = arith.mulf %95, %96 : vector<2x512xf32>
    %98 = arith.mulf %84, %6 : vector<1x512xf32>
    %cst_30 = arith.constant 0.000000e+00 : f32
    %99 = vector.broadcast %cst_30 : f32 to vector<5x512xf32>
    %100 = tpu.concatenate %97, %98, %99 in 0 : vector<2x512xf32>, vector<1x512xf32>, vector<5x512xf32> -> vector<8x512xf32>
    %c1 = arith.constant 1 : index
    %c0_31 = arith.constant 0 : index
    %c0_32 = arith.constant 0 : index
    %101 = vector.load %arg9[%c1, %c0_31, %c0_32] : memref<2x8x512xf32, #tpu.memory_space<vmem>>, vector<1x8x512xf32>
    %102 = vector.shape_cast %101 : vector<1x8x512xf32> to vector<8x512xf32>
    %103 = vector.shape_cast %100 : vector<8x512xf32> to vector<1x8x512xf32>
    tpu.vector_store %arg9[%c1, %c0_31, %c0_32], %103 {strides = array<i32>} : memref<2x8x512xf32, #tpu.memory_space<vmem>>, vector<1x8x512xf32>,
    return
  }
  func.func @transform_0(%arg0: i32) -> i32 {
    %c0_i32 = arith.constant 0 : i32
    %c0_i32_0 = arith.constant 0 : i32
    return %c0_i32 : i32
  }
  func.func @transform_1(%arg0: i32) -> (i32, i32) {
    %c0_i32 = arith.constant 0 : i32
    %c0_i32_0 = arith.constant 0 : i32
    %c0_i32_1 = arith.constant 0 : i32
    return %c0_i32, %c0_i32_0 : i32, i32
  }
  func.func @transform_2(%arg0: i32) -> (i32, i32, i32) {
    %c0_i32 = arith.constant 0 : i32
    %c0_i32_0 = arith.constant 0 : i32
    %c0_i32_1 = arith.constant 0 : i32
    return %arg0, %c0_i32, %c0_i32_0 : i32, i32, i32
  }
  func.func @transform_3(%arg0: i32) -> (i32, i32, i32) {
    %c0_i32 = arith.constant 0 : i32
    %c0_i32_0 = arith.constant 0 : i32
    %c0_i32_1 = arith.constant 0 : i32
    return %arg0, %c0_i32, %c0_i32_0 : i32, i32, i32
  }
  func.func @transform_4(%arg0: i32) -> (i32, i32) {
    %c0_i32 = arith.constant 0 : i32
    %c0_i32_0 = arith.constant 0 : i32
    %c0_i32_1 = arith.constant 0 : i32
    return %c0_i32, %c0_i32_0 : i32, i32
  }
  func.func @transform_5(%arg0: i32) -> (i32, i32) {
    %c0_i32 = arith.constant 0 : i32
    %c0_i32_0 = arith.constant 0 : i32
    %c0_i32_1 = arith.constant 0 : i32
    return %c0_i32, %c0_i32_0 : i32, i32
  }
  func.func @transform_6(%arg0: i32) -> (i32, i32) {
    %c0_i32 = arith.constant 0 : i32
    %c0_i32_0 = arith.constant 0 : i32
    %c0_i32_1 = arith.constant 0 : i32
    return %c0_i32, %c0_i32_0 : i32, i32
  }
  func.func @transform_7(%arg0: i32) -> (i32, i32) {
    %c0_i32 = arith.constant 0 : i32
    %c0_i32_0 = arith.constant 0 : i32
    %c0_i32_1 = arith.constant 0 : i32
    return %c0_i32, %c0_i32_0 : i32, i32
  }
  func.func @transform_8(%arg0: i32) -> (i32, i32, i32) {
    %c0_i32 = arith.constant 0 : i32
    %c0_i32_0 = arith.constant 0 : i32
    %c0_i32_1 = arith.constant 0 : i32
    return %c0_i32, %c0_i32_0, %arg0 : i32, i32, i32
  }
}

</mosaic_0001>

<llo_original>
// kernel: squeeze.7
$region0: #{squeeze.7}
  %s0 = inlined_call_operand.vmem [shape: f32[2,1024], index: 0, kind: input, shape index: {}]
  %s1 = inlined_call_operand.vmem [shape: f32[2,2,2,16,16], index: 1, kind: output, shape index: {}]
  $region1: #{squeeze.7} parent=0
    #allocation0 [shape = 'u8[32768]{0}', space=vmem, size = 0x8000, scoped, tag = 'scoped mem for input reshape']
    %s3 = ssub.s32 4, 1
    %s4 = scalar_lea.vmem %s0, 14
    %v5 = vld [vmem:[%s4] sm:%s3]
    %s6 = scalar_lea.vmem [#allocation0], 56
    %7 = vst [vmem:[%s6] sm:%s3] %v5
    %s8 = scalar_lea.vmem %s0, 12
    %v9 = vld [vmem:[%s8] sm:%s3]
    %s10 = scalar_lea.vmem [#allocation0], 48
    %11 = vst [vmem:[%s10] sm:%s3] %v9
    %s12 = scalar_lea.vmem %s0, 10
    %v13 = vld [vmem:[%s12] sm:%s3]
    %s14 = scalar_lea.vmem [#allocation0], 40
    %15 = vst [vmem:[%s14] sm:%s3] %v13
    %s16 = scalar_lea.vmem %s0, 8
    %v17 = vld [vmem:[%s16] sm:%s3]
    %s18 = scalar_lea.vmem [#allocation0], 32
    %19 = vst [vmem:[%s18] sm:%s3] %v17
    %s20 = scalar_lea.vmem %s0, 6
    %v21 = vld [vmem:[%s20] sm:%s3]
    %s22 = scalar_lea.vmem [#allocation0], 24
    %23 = vst [vmem:[%s22] sm:%s3] %v21
    %s24 = scalar_lea.vmem %s0, 4
    %v25 = vld [vmem:[%s24] sm:%s3]
    %s26 = scalar_lea.vmem [#allocation0], 16
    %27 = vst [vmem:[%s26] sm:%s3] %v25
    %s28 = scalar_lea.vmem %s0, 2
    %v29 = vld [vmem:[%s28] sm:%s3]
    %s30 = scalar_lea.vmem [#allocation0], 8
    %31 = vst [vmem:[%s30] sm:%s3] %v29
    %v32 = vld [vmem:[%s0] sm:%s3]
    %33 = vst [vmem:[#allocation0] sm:%s3] %v32
    %v34 = vld [vmem:[#allocation0] sm:$0x3]
    %vm35 = vcmask 130048
    %36 = vst.msk [vmem:[%s1] sm:$0x1] %vm35, %v34
    %s37 = scalar_lea.vmem %s1, 63
    %38 = vst.msk [vmem:[%s37] sm:$0x2] %vm35, %v34
    %s39 = scalar_lea.vmem [#allocation0], 8
    %v40 = vld [vmem:[%s39] sm:$0x3]
    %vm41 = vcmask 130048
    %s42 = scalar_lea.vmem %s1, 8
    %43 = vst.msk [vmem:[%s42] sm:$0x1] %vm41, %v40
    %s44 = scalar_lea.vmem %s1, 71
    %45 = vst.msk [vmem:[%s44] sm:$0x2] %vm41, %v40
    %s46 = scalar_lea.vmem [#allocation0], 16
    %v47 = vld [vmem:[%s46] sm:$0x3]
    %vm48 = vcmask 130048
    %s49 = scalar_lea.vmem %s1, 16
    %50 = vst.msk [vmem:[%s49] sm:$0x1] %vm48, %v47
    %s51 = scalar_lea.vmem %s1, 79
    %52 = vst.msk [vmem:[%s51] sm:$0x2] %vm48, %v47
    %s53 = scalar_lea.vmem [#allocation0], 24
    %v54 = vld [vmem:[%s53] sm:$0x3]
    %vm55 = vcmask 130048
    %s56 = scalar_lea.vmem %s1, 24
    %57 = vst.msk [vmem:[%s56] sm:$0x1] %vm55, %v54
    %s58 = scalar_lea.vmem %s1, 87
    %59 = vst.msk [vmem:[%s58] sm:$0x2] %vm55, %v54
    %s60 = scalar_lea.vmem [#allocation0], 32
    %v61 = vld [vmem:[%s60] sm:$0x3]
    %vm62 = vcmask 130048
    %s63 = scalar_lea.vmem %s1, 32
    %64 = vst.msk [vmem:[%s63] sm:$0x1] %vm62, %v61
    %s65 = scalar_lea.vmem %s1, 95
    %66 = vst.msk [vmem:[%s65] sm:$0x2] %vm62, %v61
    %s67 = scalar_lea.vmem [#allocation0], 40
    %v68 = vld [vmem:[%s67] sm:$0x3]
    %vm69 = vcmask 130048
    %s70 = scalar_lea.vmem %s1, 40
    %71 = vst.msk [vmem:[%s70] sm:$0x1] %vm69, %v68
    %s72 = scalar_lea.vmem %s1, 103
    %73 = vst.msk [vmem:[%s72] sm:$0x2] %vm69, %v68
    %s74 = scalar_lea.vmem [#allocation0], 48
    %v75 = vld [vmem:[%s74] sm:$0x3]
    %vm76 = vcmask 130048
    %s77 = scalar_lea.vmem %s1, 48
    %78 = vst.msk [vmem:[%s77] sm:$0x1] %vm76, %v75
    %s79 = scalar_lea.vmem %s1, 111
    %80 = vst.msk [vmem:[%s79] sm:$0x2] %vm76, %v75
    %s81 = scalar_lea.vmem [#allocation0], 56
    %v82 = vld [vmem:[%s81] sm:$0x3]
    %vm83 = vcmask 130048
    %s84 = scalar_lea.vmem %s1, 56
    %85 = vst.msk [vmem:[%s84] sm:$0x1] %vm83, %v82
    %s86 = scalar_lea.vmem %s1, 119
    %87 = vst.msk [vmem:[%s86] sm:$0x2] %vm83, %v82
    %v88 = vld [vmem:[#allocation0] ss:$8 sm:$0xf]
    %s89 = scalar_lea.vmem [#allocation0], 4294967265
    %v90 = vld [vmem:[%s89] ss:$8 sm:$0xf0]
    %vm91 = vcmask 1047556
    %v92 = vsel %vm91, %v90, %v88
    %93 = vrot.lane.b32.xlu0 %v92, 112
    %v94 = vpop.permute.xlu0 %93
    %vm95 = vcmask 130048
    %s96 = scalar_lea.vmem %s1, 1
    %97 = vst.msk [vmem:[%s96] ss:$8 sm:$0xf] %vm95, %v94
    %s98 = scalar_lea.vmem %s1, 33
    %99 = vst.msk [vmem:[%s98] ss:$8 sm:$0xf0] %vm95, %v94
    %s100 = scalar_lea.vmem [#allocation0], 32
    %v101 = vld [vmem:[%s100] ss:$8 sm:$0xf]
    %s102 = scalar_lea.vmem [#allocation0], 1
    %v103 = vld [vmem:[%s102] ss:$8 sm:$0xf0]
    %vm104 = vcmask 1047556
    %v105 = vsel %vm104, %v103, %v101
    %106 = vrot.lane.b32.xlu0 %v105, 112
    %v107 = vpop.permute.xlu0 %106
    %vm108 = vcmask 130048
    %s109 = scalar_lea.vmem %s1, 33
    %110 = vst.msk [vmem:[%s109] ss:$8 sm:$0xf] %vm108, %v107
    %s111 = scalar_lea.vmem %s1, 65
    %112 = vst.msk [vmem:[%s111] ss:$8 sm:$0xf0] %vm108, %v107
    %v113 = vld [vmem:[#allocation0] ss:$8 sm:$0xf]
    %s114 = scalar_lea.vmem [#allocation0], 4294967265
    %v115 = vld [vmem:[%s114] ss:$8 sm:$0xf0]
    %vm116 = vcmask 1047556
    %v117 = vsel %vm116, %v115, %v113
    %118 = vrot.lane.b32.xlu0 %v117, 96
    %v119 = vpop.permute.xlu0 %118
    %vm120 = vcmask 130048
    %s121 = scalar_lea.vmem %s1, 2
    %122 = vst.msk [vmem:[%s121] ss:$8 sm:$0xf] %vm120, %v119
    %s123 = scalar_lea.vmem %s1, 34
    %124 = vst.msk [vmem:[%s123] ss:$8 sm:$0xf0] %vm120, %v119
    %s125 = scalar_lea.vmem [#allocation0], 32
    %v126 = vld [vmem:[%s125] ss:$8 sm:$0xf]
    %s127 = scalar_lea.vmem [#allocation0], 1
    %v128 = vld [vmem:[%s127] ss:$8 sm:$0xf0]
    %vm129 = vcmask 1047556
    %v130 = vsel %vm129, %v128, %v126
    %131 = vrot.lane.b32.xlu0 %v130, 96
    %v132 = vpop.permute.xlu0 %131
    %vm133 = vcmask 130048
    %s134 = scalar_lea.vmem %s1, 34
    %135 = vst.msk [vmem:[%s134] ss:$8 sm:$0xf] %vm133, %v132
    %s136 = scalar_lea.vmem %s1, 66
    %137 = vst.msk [vmem:[%s136] ss:$8 sm:$0xf0] %vm133, %v132
    %v138 = vld [vmem:[#allocation0] ss:$8 sm:$0xf]
    %s139 = scalar_lea.vmem [#allocation0], 4294967265
    %v140 = vld [vmem:[%s139] ss:$8 sm:$0xf0]
    %vm141 = vcmask 1047556
    %v142 = vsel %vm141, %v140, %v138
    %143 = vrot.lane.b32.xlu0 %v142, 80
    %v144 = vpop.permute.xlu0 %143
    %vm145 = vcmask 130048
    %s146 = scalar_lea.vmem %s1, 3
    %147 = vst.msk [vmem:[%s146] ss:$8 sm:$0xf] %vm145, %v144
    %s148 = scalar_lea.vmem %s1, 35
    %149 = vst.msk [vmem:[%s148] ss:$8 sm:$0xf0] %vm145, %v144
    %s150 = scalar_lea.vmem [#allocation0], 32
    %v151 = vld [vmem:[%s150] ss:$8 sm:$0xf]
    %s152 = scalar_lea.vmem [#allocation0], 1
    %v153 = vld [vmem:[%s152] ss:$8 sm:$0xf0]
    %vm154 = vcmask 1047556
    %v155 = vsel %vm154, %v153, %v151
    %156 = vrot.lane.b32.xlu0 %v155, 80
    %v157 = vpop.permute.xlu0 %156
    %vm158 = vcmask 130048
    %s159 = scalar_lea.vmem %s1, 35
    %160 = vst.msk [vmem:[%s159] ss:$8 sm:$0xf] %vm158, %v157
    %s161 = scalar_lea.vmem %s1, 67
    %162 = vst.msk [vmem:[%s161] ss:$8 sm:$0xf0] %vm158, %v157
    %v163 = vld [vmem:[#allocation0] ss:$8 sm:$0xf]
    %s164 = scalar_lea.vmem [#allocation0], 4294967265
    %v165 = vld [vmem:[%s164] ss:$8 sm:$0xf0]
    %vm166 = vcmask 1047556
    %v167 = vsel %vm166, %v165, %v163
    %168 = vrot.lane.b32.xlu0 %v167, 64
    %v169 = vpop.permute.xlu0 %168
    %vm170 = vcmask 130048
    %s171 = scalar_lea.vmem %s1, 4
    %172 = vst.msk [vmem:[%s171] ss:$8 sm:$0xf] %vm170, %v169
    %s173 = scalar_lea.vmem %s1, 36
    %174 = vst.msk [vmem:[%s173] ss:$8 sm:$0xf0] %vm170, %v169
    %s175 = scalar_lea.vmem [#allocation0], 32
    %v176 = vld [vmem:[%s175] ss:$8 sm:$0xf]
    %s177 = scalar_lea.vmem [#allocation0], 1
    %v178 = vld [vmem:[%s177] ss:$8 sm:$0xf0]
    %vm179 = vcmask 1047556
    %v180 = vsel %vm179, %v178, %v176
    %181 = vrot.lane.b32.xlu0 %v180, 64
    %v182 = vpop.permute.xlu0 %181
    %vm183 = vcmask 130048
    %s184 = scalar_lea.vmem %s1, 36
    %185 = vst.msk [vmem:[%s184] ss:$8 sm:$0xf] %vm183, %v182
    %s186 = scalar_lea.vmem %s1, 68
    %187 = vst.msk [vmem:[%s186] ss:$8 sm:$0xf0] %vm183, %v182
    %v188 = vld [vmem:[#allocation0] ss:$8 sm:$0xf]
    %s189 = scalar_lea.vmem [#allocation0], 4294967265
    %v190 = vld [vmem:[%s189] ss:$8 sm:$0xf0]
    %vm191 = vcmask 1047556
    %v192 = vsel %vm191, %v190, %v188
    %193 = vrot.lane.b32.xlu0 %v192, 48
    %v194 = vpop.permute.xlu0 %193
    %vm195 = vcmask 130048
    %s196 = scalar_lea.vmem %s1, 5
    %197 = vst.msk [vmem:[%s196] ss:$8 sm:$0xf] %vm195, %v194
    %s198 = scalar_lea.vmem %s1, 37
    %199 = vst.msk [vmem:[%s198] ss:$8 sm:$0xf0] %vm195, %v194
    %s200 = scalar_lea.vmem [#allocation0], 32
    %v201 = vld [vmem:[%s200] ss:$8 sm:$0xf]
    %s202 = scalar_lea.vmem [#allocation0], 1
    %v203 = vld [vmem:[%s202] ss:$8 sm:$0xf0]
    %vm204 = vcmask 1047556
    %v205 = vsel %vm204, %v203, %v201
    %206 = vrot.lane.b32.xlu0 %v205, 48
    %v207 = vpop.permute.xlu0 %206
    %vm208 = vcmask 130048
    %s209 = scalar_lea.vmem %s1, 37
    %210 = vst.msk [vmem:[%s209] ss:$8 sm:$0xf] %vm208, %v207
    %s211 = scalar_lea.vmem %s1, 69
    %212 = vst.msk [vmem:[%s211] ss:$8 sm:$0xf0] %vm208, %v207
    %v213 = vld [vmem:[#allocation0] ss:$8 sm:$0xf]
    %s214 = scalar_lea.vmem [#allocation0], 4294967265
    %v215 = vld [vmem:[%s214] ss:$8 sm:$0xf0]
    %vm216 = vcmask 1047556
    %v217 = vsel %vm216, %v215, %v213
    %218 = vrot.lane.b32.xlu0 %v217, 32
    %v219 = vpop.permute.xlu0 %218
    %vm220 = vcmask 130048
    %s221 = scalar_lea.vmem %s1, 6
    %222 = vst.msk [vmem:[%s221] ss:$8 sm:$0xf] %vm220, %v219
    %s223 = scalar_lea.vmem %s1, 38
    %224 = vst.msk [vmem:[%s223] ss:$8 sm:$0xf0] %vm220, %v219
    %s225 = scalar_lea.vmem [#allocation0], 32
    %v226 = vld [vmem:[%s225] ss:$8 sm:$0xf]
    %s227 = scalar_lea.vmem [#allocation0], 1
    %v228 = vld [vmem:[%s227] ss:$8 sm:$0xf0]
    %vm229 = vcmask 1047556
    %v230 = vsel %vm229, %v228, %v226
    %231 = vrot.lane.b32.xlu0 %v230, 32
    %v232 = vpop.permute.xlu0 %231
    %vm233 = vcmask 130048
    %s234 = scalar_lea.vmem %s1, 38
    %235 = vst.msk [vmem:[%s234] ss:$8 sm:$0xf] %vm233, %v232
    %s236 = scalar_lea.vmem %s1, 70
    %237 = vst.msk [vmem:[%s236] ss:$8 sm:$0xf0] %vm233, %v232
    %v238 = vld [vmem:[#allocation0] ss:$8 sm:$0xf]
    %s239 = scalar_lea.vmem [#allocation0], 4294967265
    %v240 = vld [vmem:[%s239] ss:$8 sm:$0xf0]
    %vm241 = vcmask 1047556
    %v242 = vsel %vm241, %v240, %v238
    %243 = vrot.lane.b32.xlu0 %v242, 16
    %v244 = vpop.permute.xlu0 %243
    %vm245 = vcmask 130048
    %s246 = scalar_lea.vmem %s1, 7
    %247 = vst.msk [vmem:[%s246] ss:$8 sm:$0xf] %vm245, %v244
    %s248 = scalar_lea.vmem %s1, 39
    %249 = vst.msk [vmem:[%s248] ss:$8 sm:$0xf0] %vm245, %v244
    %s250 = scalar_lea.vmem [#allocation0], 32
    %v251 = vld [vmem:[%s250] ss:$8 sm:$0xf]
    %s252 = scalar_lea.vmem [#allocation0], 1
    %v253 = vld [vmem:[%s252] ss:$8 sm:$0xf0]
    %vm254 = vcmask 1047556
    %v255 = vsel %vm254, %v253, %v251
    %256 = vrot.lane.b32.xlu0 %v255, 16
    %v257 = vpop.permute.xlu0 %256
    %vm258 = vcmask 130048
    %s259 = scalar_lea.vmem %s1, 39
    %260 = vst.msk [vmem:[%s259] ss:$8 sm:$0xf] %vm258, %v257
    %s261 = scalar_lea.vmem %s1, 71
    %262 = vst.msk [vmem:[%s261] ss:$8 sm:$0xf0] %vm258, %v257

// kernel: _slim_forward.1
$region0: #{_slim_forward.1}
  #allocation0 [shape = 'u32[]', space=smem, size = 0x4, offset = 0x4, fixed_abs, tag = 'smem constant byte address 0x4 - core index']
  #allocation1 [shape = 'u32[72,128]{1,0:T(1,128)}', space=vmem, size = 0x9000, scoped, tag = 'internal scratch']
  #allocation2 [shape = 'f32[1]{0:T(128)S(6)}', space=smem, size = 0x200, scoped, tag = 'scoped memory for _slim_forward.1']
  %s0 = inlined_call_operand.<no memory space> [shape: f32[1], index: 0, kind: input, shape index: {}]
  %s1 = inlined_call_operand.vmem [shape: f32[512,8], index: 1, kind: input, shape index: {}]
  %s2 = inlined_call_operand.vmem [shape: f32[2,1,512], index: 2, kind: input, shape index: {}]
  %s3 = inlined_call_operand.vmem [shape: f32[2,32,8], index: 3, kind: input, shape index: {}]
  %s4 = inlined_call_operand.vmem [shape: f32[32,8], index: 4, kind: input, shape index: {}]
  %s5 = inlined_call_operand.vmem [shape: f32[32,1], index: 5, kind: input, shape index: {}]
  %s6 = inlined_call_operand.vmem [shape: f32[8,32], index: 6, kind: input, shape index: {}]
  %s7 = inlined_call_operand.vmem [shape: f32[8,1], index: 7, kind: input, shape index: {}]
  %s8 = inlined_call_operand.vmem [shape: f32[2,8,1024], index: 8, kind: output, shape index: {}]
  %s9 = sld [smem:[#allocation0]]
  $region84: #{_slim_forward.1} parent=0
    _
  %s11 = ssub.s32 1, %s9
  %s12 = scalar_select 0, %s11, %s9
  %13 = sst [smem:[#allocation2]] %s0
  $region1: #{_slim_forward.1} parent=0
    #allocation3 [shape = 'u8[65536]{0}', space=vmem, size = 0x10000, scoped, tag = 'output window, operand 0']
    loop: start=0, step=1, limit=4
    $region2: #{_slim_forward.1} parent=1 // loop_pre_header
      _
    $region3: #{_slim_forward.1} parent=1 // loop_header
      %s15 = sphi 0, %s19
      %p16 = scmp.ge.s32.totalorder %s15, 4
      %s23 = sphi 0, %s23
      %s25 = sphi 0, %s23
      %s26 = sphi 0, %s25
      %s40 = sphi 0, %s26
      %s44 = sphi 0, %s44
      %s46 = sphi 0, %s44
      %s47 = sphi 0, %s46
      %s61 = sphi 0, %s47
      %s67 = sphi 0, %s69
      %s70 = sphi 0, %s67
      %s71 = sphi 0, %s70
      %s87 = sphi 0, %s71
      %s93 = sphi 0, %s95
      %s96 = sphi 0, %s93
      %s97 = sphi 0, %s96
      %s113 = sphi 0, %s97
      %s117 = sphi 0, %s117
      %s119 = sphi 0, %s117
      %s120 = sphi 0, %s119
      %s134 = sphi 0, %s120
      %s138 = sphi 0, %s138
      %s140 = sphi 0, %s138
      %s141 = sphi 0, %s140
      %s155 = sphi 0, %s141
      %s159 = sphi 0, %s159
      %s161 = sphi 0, %s159
      %s162 = sphi 0, %s161
      %s176 = sphi 0, %s162
      %s180 = sphi 0, %s180
      %s182 = sphi 0, %s180
      %s183 = sphi 0, %s182
      %s197 = sphi 0, %s183
      %s203 = sphi 0, %s205
      %s206 = sphi 0, %s203
      %s207 = sphi 0, %s206
      %s223 = sphi 0, %s207
    $region4: #{_slim_forward.1} parent=1 // loop_header_branch
      %18 = sbr.rel (%p16) target = $region8
    $region5: #{_slim_forward.1} parent=1 // loop_body
      %s20 = ssub.s32 %s15, 1
      %s21 = ssub.s32 %s15, 2
      %s22 = sadd.s32 %s15, 1
      %s24 = sadd.s32 %s23, 1
      %p27 = scmp.eq.s32.totalorder %s15, 1
      %p28 = scmp.ne.s32.totalorder %s23, %s25
      %p29 = scmp.eq.s32.totalorder %s15, 0
      %p30 = por %p28, %p29
      %p31 = scmp.ne.s32.totalorder %s23, %s25
      %p32 = scmp.eq.s32.totalorder %s20, 1
      %p33 = por %p31, %p32
      %p34 = scmp.ne.s32.totalorder %s25, %s26
      %p35 = scmp.eq.s32.totalorder %s20, 0
      %p36 = por %p34, %p35
      %p37 = scmp.ne.s32.totalorder %s25, %s26
      %p38 = scmp.eq.s32.totalorder %s21, 1
      %p39 = por %p37, %p38
      %p41 = scmp.ne.s32.totalorder %s26, %s40
      %p42 = scmp.eq.s32.totalorder %s21, 0
      %p43 = por %p41, %p42
      %s45 = sadd.s32 %s44, 1
      %p48 = scmp.eq.s32.totalorder %s15, 1
      %p49 = scmp.ne.s32.totalorder %s44, %s46
      %p50 = scmp.eq.s32.totalorder %s15, 0
      %p51 = por %p49, %p50
      %p52 = scmp.ne.s32.totalorder %s44, %s46
      %p53 = scmp.eq.s32.totalorder %s20, 1
      %p54 = por %p52, %p53
      %p55 = scmp.ne.s32.totalorder %s46, %s47
      %p56 = scmp.eq.s32.totalorder %s20, 0
      %p57 = por %p55, %p56
      %p58 = scmp.ne.s32.totalorder %s46, %s47
      %p59 = scmp.eq.s32.totalorder %s21, 1
      %p60 = por %p58, %p59
      %p62 = scmp.ne.s32.totalorder %s47, %s61
      %p63 = scmp.eq.s32.totalorder %s21, 0
      %p64 = por %p62, %p63
      %s65 = ssub.s32 %s15, %s22
      %p66 = scmp.eq.s32.totalorder %s65, 0
      %s68 = sadd.s32 %s67, 1
      %s69 = scalar_select %p66, %s67, %s68
      %p72 = pneg %p66
      %p73 = scmp.eq.s32.totalorder %s15, 1
      %p74 = por %p72, %p73
      %p75 = scmp.ne.s32.totalorder %s67, %s70
      %p76 = scmp.eq.s32.totalorder %s15, 0
      %p77 = por %p75, %p76
      %p78 = scmp.ne.s32.totalorder %s67, %s70
      %p79 = scmp.eq.s32.totalorder %s20, 1
      %p80 = por %p78, %p79
      %p81 = scmp.ne.s32.totalorder %s70, %s71
      %p82 = scmp.eq.s32.totalorder %s20, 0
      %p83 = por %p81, %p82
      %p84 = scmp.ne.s32.totalorder %s70, %s71
      %p85 = scmp.eq.s32.totalorder %s21, 1
      %p86 = por %p84, %p85
      %p88 = scmp.ne.s32.totalorder %s71, %s87
      %p89 = scmp.eq.s32.totalorder %s21, 0
      %p90 = por %p88, %p89
      %s91 = ssub.s32 %s15, %s22
      %p92 = scmp.eq.s32.totalorder %s91, 0
      %s94 = sadd.s32 %s93, 1
      %s95 = scalar_select %p92, %s93, %s94
      %p98 = pneg %p92
      %p99 = scmp.eq.s32.totalorder %s15, 1
      %p100 = por %p98, %p99
      %p101 = scmp.ne.s32.totalorder %s93, %s96
      %p102 = scmp.eq.s32.totalorder %s15, 0
      %p103 = por %p101, %p102
      %p104 = scmp.ne.s32.totalorder %s93, %s96
      %p105 = scmp.eq.s32.totalorder %s20, 1
      %p106 = por %p104, %p105
      %p107 = scmp.ne.s32.totalorder %s96, %s97
      %p108 = scmp.eq.s32.totalorder %s20, 0
      %p109 = por %p107, %p108
      %p110 = scmp.ne.s32.totalorder %s96, %s97
      %p111 = scmp.eq.s32.totalorder %s21, 1
      %p112 = por %p110, %p111
      %p114 = scmp.ne.s32.totalorder %s97, %s113
      %p115 = scmp.eq.s32.totalorder %s21, 0
      %p116 = por %p114, %p115
      %s118 = sadd.s32 %s117, 1
      %p121 = scmp.eq.s32.totalorder %s15, 1
      %p122 = scmp.ne.s32.totalorder %s117, %s119
      %p123 = scmp.eq.s32.totalorder %s15, 0
      %p124 = por %p122, %p123
      %p125 = scmp.ne.s32.totalorder %s117, %s119
      %p126 = scmp.eq.s32.totalorder %s20, 1
      %p127 = por %p125, %p126
      %p128 = scmp.ne.s32.totalorder %s119, %s120
      %p129 = scmp.eq.s32.totalorder %s20, 0
      %p130 = por %p128, %p129
      %p131 = scmp.ne.s32.totalorder %s119, %s120
      %p132 = scmp.eq.s32.totalorder %s21, 1
      %p133 = por %p131, %p132
      %p135 = scmp.ne.s32.totalorder %s120, %s134
      %p136 = scmp.eq.s32.totalorder %s21, 0
      %p137 = por %p135, %p136
      %s139 = sadd.s32 %s138, 1
      %p142 = scmp.eq.s32.totalorder %s15, 1
      %p143 = scmp.ne.s32.totalorder %s138, %s140
      %p144 = scmp.eq.s32.totalorder %s15, 0
      %p145 = por %p143, %p144
      %p146 = scmp.ne.s32.totalorder %s138, %s140
      %p147 = scmp.eq.s32.totalorder %s20, 1
      %p148 = por %p146, %p147
      %p149 = scmp.ne.s32.totalorder %s140, %s141
      %p150 = scmp.eq.s32.totalorder %s20, 0
      %p151 = por %p149, %p150
      %p152 = scmp.ne.s32.totalorder %s140, %s141
      %p153 = scmp.eq.s32.totalorder %s21, 1
      %p154 = por %p152, %p153
      %p156 = scmp.ne.s32.totalorder %s141, %s155
      %p157 = scmp.eq.s32.totalorder %s21, 0
      %p158 = por %p156, %p157
      %s160 = sadd.s32 %s159, 1
      %p163 = scmp.eq.s32.totalorder %s15, 1
      %p164 = scmp.ne.s32.totalorder %s159, %s161
      %p165 = scmp.eq.s32.totalorder %s15, 0
      %p166 = por %p164, %p165
      %p167 = scmp.ne.s32.totalorder %s159, %s161
      %p168 = scmp.eq.s32.totalorder %s20, 1
      %p169 = por %p167, %p168
      %p170 = scmp.ne.s32.totalorder %s161, %s162
      %p171 = scmp.eq.s32.totalorder %s20, 0
      %p172 = por %p170, %p171
      %p173 = scmp.ne.s32.totalorder %s161, %s162
      %p174 = scmp.eq.s32.totalorder %s21, 1
      %p175 = por %p173, %p174
      %p177 = scmp.ne.s32.totalorder %s162, %s176
      %p178 = scmp.eq.s32.totalorder %s21, 0
      %p179 = por %p177, %p178
      %s181 = sadd.s32 %s180, 1
      %p184 = scmp.eq.s32.totalorder %s15, 1
      %p185 = scmp.ne.s32.totalorder %s180, %s182
      %p186 = scmp.eq.s32.totalorder %s15, 0
      %p187 = por %p185, %p186
      %p188 = scmp.ne.s32.totalorder %s180, %s182
      %p189 = scmp.eq.s32.totalorder %s20, 1
      %p190 = por %p188, %p189
      %p191 = scmp.ne.s32.totalorder %s182, %s183
      %p192 = scmp.eq.s32.totalorder %s20, 0
      %p193 = por %p191, %p192
      %p194 = scmp.ne.s32.totalorder %s182, %s183
      %p195 = scmp.eq.s32.totalorder %s21, 1
      %p196 = por %p194, %p195
      %p198 = scmp.ne.s32.totalorder %s183, %s197
      %p199 = scmp.eq.s32.totalorder %s21, 0
      %p200 = por %p198, %p199
      %s201 = ssub.s32 %s15, %s22
      %p202 = scmp.eq.s32.totalorder %s201, 0
      %s204 = sadd.s32 %s203, 1
      %s205 = scalar_select %p202, %s203, %s204
      %p208 = pneg %p202
      %p209 = scmp.eq.s32.totalorder %s15, 1
      %p210 = por %p208, %p209
      %p211 = scmp.ne.s32.totalorder %s203, %s206
      %p212 = scmp.eq.s32.totalorder %s15, 0
      %p213 = por %p211, %p212
      %p214 = scmp.ne.s32.totalorder %s203, %s206
      %p215 = scmp.eq.s32.totalorder %s20, 1
      %p216 = por %p214, %p215
      %p217 = scmp.ne.s32.totalorder %s206, %s207
      %p218 = scmp.eq.s32.totalorder %s20, 0
      %p219 = por %p217, %p218
      %p220 = scmp.ne.s32.totalorder %s206, %s207
      %p221 = scmp.eq.s32.totalorder %s21, 1
      %p222 = por %p220, %p221
      %p224 = scmp.ne.s32.totalorder %s207, %s223
      %p225 = scmp.eq.s32.totalorder %s21, 0
      %p226 = por %p224, %p225
      %p227 = scmp.le.s32.totalorder 1, %s15
      %p228 = scmp.lt.s32.totalorder %s15, 3
      %p229 = pnand %p227, %p228
      %p230 = pneg %p229
      // Predicated region
      $region9: #{_slim_forward.1} parent=5 // pred_check
        _
      $region10: #{_slim_forward.1} parent=5 // pred_check_branch
        %232 = sbr.rel (%p229) target = $region12
      $region11: #{_slim_forward.1} parent=5 // pred_region
        %s233 = ssub.s32 %s15, 1
        // Predicated region
        $region13: #{_slim_forward.1} parent=11 // pred_check
          %p234 = pneg %p36
        $region14: #{_slim_forward.1} parent=11 // pred_check_branch
          %236 = sbr.rel (%p234) target = $region16
        $region15: #{_slim_forward.1} parent=11 // pred_region
          _
        $region16: #{_slim_forward.1} parent=11 // pred_fallthru
          _
        // Predicated region
        $region17: #{_slim_forward.1} parent=11 // pred_check
          %p237 = pneg %p57
        $region18: #{_slim_forward.1} parent=11 // pred_check_branch
          %239 = sbr.rel (%p237) target = $region20
        $region19: #{_slim_forward.1} parent=11 // pred_region
          _
        $region20: #{_slim_forward.1} parent=11 // pred_fallthru
          _
        // Predicated region
        $region21: #{_slim_forward.1} parent=11 // pred_check
          %p240 = pneg %p130
        $region22: #{_slim_forward.1} parent=11 // pred_check_branch
          %242 = sbr.rel (%p240) target = $region24
        $region23: #{_slim_forward.1} parent=11 // pred_region
          _
        $region24: #{_slim_forward.1} parent=11 // pred_fallthru
          _
        // Predicated region
        $region25: #{_slim_forward.1} parent=11 // pred_check
          %p243 = pneg %p151
        $region26: #{_slim_forward.1} parent=11 // pred_check_branch
          %245 = sbr.rel (%p243) target = $region28
        $region27: #{_slim_forward.1} parent=11 // pred_region
          _
        $region28: #{_slim_forward.1} parent=11 // pred_fallthru
          _
        // Predicated region
        $region29: #{_slim_forward.1} parent=11 // pred_check
          %p246 = pneg %p172
        $region30: #{_slim_forward.1} parent=11 // pred_check_branch
          %248 = sbr.rel (%p246) target = $region32
        $region31: #{_slim_forward.1} parent=11 // pred_region
          _
        $region32: #{_slim_forward.1} parent=11 // pred_fallthru
          _
        // Predicated region
        $region33: #{_slim_forward.1} parent=11 // pred_check
          %p249 = pneg %p193
        $region34: #{_slim_forward.1} parent=11 // pred_check_branch
          %251 = sbr.rel (%p249) target = $region36
        $region35: #{_slim_forward.1} parent=11 // pred_region
          _
        $region36: #{_slim_forward.1} parent=11 // pred_fallthru
          _
      $region12: #{_slim_forward.1} parent=5 // pred_fallthru
        _
      %p252 = scmp.lt.s32.totalorder %s15, 2
      // Predicated region
      $region37: #{_slim_forward.1} parent=5 // pred_check
        %p253 = pneg %p252
      $region38: #{_slim_forward.1} parent=5 // pred_check_branch
        %255 = sbr.rel (%p253) target = $region40
      $region39: #{_slim_forward.1} parent=5 // pred_region
        // Predicated region
        $region41: #{_slim_forward.1} parent=39 // pred_check
          %p256 = pneg %p77
        $region42: #{_slim_forward.1} parent=39 // pred_check_branch
          %258 = sbr.rel (%p256) target = $region44
        $region43: #{_slim_forward.1} parent=39 // pred_region
          %p259 = scmp.lt.s32.totalorder %s15, 1
          %s260 = scalar_select %p259, %s15, 1
          %s261 = smul.addr %s260, 4
          %s262 = scalar_lea.vmem %s2, %s261
        $region44: #{_slim_forward.1} parent=39 // pred_fallthru
          _
        // Predicated region
        $region45: #{_slim_forward.1} parent=39 // pred_check
          %p263 = pneg %p103
        $region46: #{_slim_forward.1} parent=39 // pred_check_branch
          %265 = sbr.rel (%p263) target = $region48
        $region47: #{_slim_forward.1} parent=39 // pred_region
          %p266 = scmp.lt.s32.totalorder %s15, 1
          %s267 = scalar_select %p266, %s15, 1
          %s268 = smul.addr %s267, 4
          %s269 = smul.addr %s268, 8
          %s270 = scalar_lea.vmem %s3, %s269
        $region48: #{_slim_forward.1} parent=39 // pred_fallthru
          _
      $region40: #{_slim_forward.1} parent=5 // pred_fallthru
        _
      %p271 = scmp.le.s32.totalorder 1, %s15
      %p272 = scmp.lt.s32.totalorder %s15, 3
      %p273 = pnand %p271, %p272
      %p274 = pneg %p273
      // Predicated region
      $region49: #{_slim_forward.1} parent=5 // pred_check
        _
      $region50: #{_slim_forward.1} parent=5 // pred_check_branch
        %276 = sbr.rel (%p273) target = $region52
      $region51: #{_slim_forward.1} parent=5 // pred_region
        %s277 = ssub.s32 %s15, 1
        %p278 = pneg %p36
        %p279 = pneg %p33
        %p280 = pneg %p57
        %p281 = pneg %p54
        %p282 = scmp.lt.s32.totalorder %s20, 1
        %s283 = scalar_select %p282, %s20, 1
        %s284 = smul.addr %s283, 4
        %s285 = scalar_lea.vmem %s2, %s284
        %p286 = pneg %p83
        %p287 = pneg %p80
        %p288 = scmp.lt.s32.totalorder %s20, 1
        %s289 = scalar_select %p288, %s20, 1
        %s290 = smul.addr %s289, 4
        %s291 = smul.addr %s290, 8
        %s292 = scalar_lea.vmem %s3, %s291
        %p293 = pneg %p109
        %p294 = pneg %p106
        %p295 = pneg %p130
        %p296 = pneg %p127
        %p297 = pneg %p151
        %p298 = pneg %p148
        %p299 = pneg %p172
        %p300 = pneg %p169
        %p301 = pneg %p193
        %p302 = pneg %p190
        %p303 = pneg %p219
        %p304 = pneg %p216
        %s305 = sand.u32 %s206, 1
        %s306 = sand.u32 %s206, 1
        %s307 = smul.addr %s306, 64
        %s308 = scalar_lea.vmem [#allocation3], %s307
        %p309 = scmp.lt.s32.totalorder %s20, 1
        %s310 = scalar_select %p309, %s20, 1
        %s311 = smul.addr %s310, 4
        %s312 = scalar_lea.vmem %s2, %s311
        %p313 = scmp.lt.s32.totalorder %s20, 1
        %s314 = scalar_select %p313, %s20, 1
        %s315 = smul.addr %s314, 4
        %s316 = smul.addr %s315, 8
        %s317 = scalar_lea.vmem %s3, %s316
        %s318 = smul.u32 4, %s20
        %s319 = sld [smem:[#allocation2]]
        %v320 = vld [vmem:[%s312] sm:$0xf]
        %vm321 = vcmp.gt.f32.partialorder %v320, 0.5
        %v322 = vsel %vm321, 1, 0
        %v323 = vcvt.s32.f32 %v322
        %v324 = vld [vmem:[%s317] sm:$0xff]
        %v325 = vld [vmem:[%s317 + $0x8] sm:$0xff]
        %v326 = vld [vmem:[%s317 + $0x10] sm:$0xff]
        %v327 = vld [vmem:[%s317 + $0x18] sm:$0xff]
        %v328 = vld [vmem:[%s1] sm:$0xff]
        %v329 = vld [vmem:[%s1 + $0x8] sm:$0xff]
        %v330 = vld [vmem:[%s1 + $0x10] sm:$0xff]
        %v331 = vld [vmem:[%s1 + $0x18] sm:$0xff]
        %v332 = vld [vmem:[%s1 + $0x20] sm:$0xff]
        %v333 = vld [vmem:[%s1 + $0x28] sm:$0xff]
        %v334 = vld [vmem:[%s1 + $0x30] sm:$0xff]
        %v335 = vld [vmem:[%s1 + $0x38] sm:$0xff]
        %v336 = vld [vmem:[%s1 + $0x40] sm:$0xff]
        %v337 = vld [vmem:[%s1 + $0x48] sm:$0xff]
        %v338 = vld [vmem:[%s1 + $0x50] sm:$0xff]
        %v339 = vld [vmem:[%s1 + $0x58] sm:$0xff]
        %v340 = vld [vmem:[%s1 + $0x60] sm:$0xff]
        %v341 = vld [vmem:[%s1 + $0x68] sm:$0xff]
        %v342 = vld [vmem:[%s1 + $0x70] sm:$0xff]
        %v343 = vld [vmem:[%s1 + $0x78] sm:$0xff]
        %v344 = vld [vmem:[%s1 + $0x80] sm:$0xff]
        %v345 = vld [vmem:[%s1 + $0x88] sm:$0xff]
        %v346 = vld [vmem:[%s1 + $0x90] sm:$0xff]
        %v347 = vld [vmem:[%s1 + $0x98] sm:$0xff]
        %v348 = vld [vmem:[%s1 + $0xa0] sm:$0xff]
        %v349 = vld [vmem:[%s1 + $0xa8] sm:$0xff]
        %v350 = vld [vmem:[%s1 + $0xb0] sm:$0xff]
        %v351 = vld [vmem:[%s1 + $0xb8] sm:$0xff]
        %v352 = vld [vmem:[%s1 + $0xc0] sm:$0xff]
        %v353 = vld [vmem:[%s1 + $0xc8] sm:$0xff]
        %v354 = vld [vmem:[%s1 + $0xd0] sm:$0xff]
        %v355 = vld [vmem:[%s1 + $0xd8] sm:$0xff]
        %v356 = vld [vmem:[%s1 + $0xe0] sm:$0xff]
        %v357 = vld [vmem:[%s1 + $0xe8] sm:$0xff]
        %v358 = vld [vmem:[%s1 + $0xf0] sm:$0xff]
        %v359 = vld [vmem:[%s1 + $0xf8] sm:$0xff]
        %v360 = vld [vmem:[%s1 + $0x100] sm:$0xff]
        %v361 = vld [vmem:[%s1 + $0x108] sm:$0xff]
        %v362 = vld [vmem:[%s1 + $0x110] sm:$0xff]
        %v363 = vld [vmem:[%s1 + $0x118] sm:$0xff]
        %v364 = vld [vmem:[%s1 + $0x120] sm:$0xff]
        %v365 = vld [vmem:[%s1 + $0x128] sm:$0xff]
        %v366 = vld [vmem:[%s1 + $0x130] sm:$0xff]
        %v367 = vld [vmem:[%s1 + $0x138] sm:$0xff]
        %v368 = vld [vmem:[%s1 + $0x140] sm:$0xff]
        %v369 = vld [vmem:[%s1 + $0x148] sm:$0xff]
        %v370 = vld [vmem:[%s1 + $0x150] sm:$0xff]
        %v371 = vld [vmem:[%s1 + $0x158] sm:$0xff]
        %v372 = vld [vmem:[%s1 + $0x160] sm:$0xff]
        %v373 = vld [vmem:[%s1 + $0x168] sm:$0xff]
        %v374 = vld [vmem:[%s1 + $0x170] sm:$0xff]
        %v375 = vld [vmem:[%s1 + $0x178] sm:$0xff]
        %v376 = vld [vmem:[%s1 + $0x180] sm:$0xff]
        %v377 = vld [vmem:[%s1 + $0x188] sm:$0xff]
        %v378 = vld [vmem:[%s1 + $0x190] sm:$0xff]
        %v379 = vld [vmem:[%s1 + $0x198] sm:$0xff]
        %v380 = vld [vmem:[%s1 + $0x1a0] sm:$0xff]
        %v381 = vld [vmem:[%s1 + $0x1a8] sm:$0xff]
        %v382 = vld [vmem:[%s1 + $0x1b0] sm:$0xff]
        %v383 = vld [vmem:[%s1 + $0x1b8] sm:$0xff]
        %v384 = vld [vmem:[%s1 + $0x1c0] sm:$0xff]
        %v385 = vld [vmem:[%s1 + $0x1c8] sm:$0xff]
        %v386 = vld [vmem:[%s1 + $0x1d0] sm:$0xff]
        %v387 = vld [vmem:[%s1 + $0x1d8] sm:$0xff]
        %v388 = vld [vmem:[%s1 + $0x1e0] sm:$0xff]
        %v389 = vld [vmem:[%s1 + $0x1e8] sm:$0xff]
        %v390 = vld [vmem:[%s1 + $0x1f0] sm:$0xff]
        %v391 = vld [vmem:[%s1 + $0x1f8] sm:$0xff]
        %v392 = vld [vmem:[%s5] sm:$0xff]
        %v393 = vld [vmem:[%s5 + $0x8] sm:$0xff]
        %v394 = vld [vmem:[%s5 + $0x10] sm:$0xff]
        %v395 = vld [vmem:[%s5 + $0x18] sm:$0xff]
        %397 = vset.pattern.permute.xlu0 0
        %398 = vperm.xlu0 %397, %v392
        %v399 = vpop.permute.xlu0 %398
        %402 = vset.pattern.permute.xlu0 0
        %403 = vperm.xlu0 %402, %v393
        %v404 = vpop.permute.xlu0 %403
        %407 = vset.pattern.permute.xlu0 0
        %408 = vperm.xlu0 %407, %v394
        %v409 = vpop.permute.xlu0 %408
        %412 = vset.pattern.permute.xlu0 0
        %413 = vperm.xlu0 %412, %v395
        %v414 = vpop.permute.xlu0 %413
        %vm416 = vcmask 64512
        %v418 = vsel %vm416, %v324, 0
        %v421 = vsel %vm416, %v325, 0
        %v424 = vsel %vm416, %v326, 0
        %v427 = vsel %vm416, %v327, 0
        %v430 = vsel %vm416, %v328, 0
        %v433 = vsel %vm416, %v329, 0
        %v436 = vsel %vm416, %v330, 0
        %v439 = vsel %vm416, %v331, 0
        %v442 = vsel %vm416, %v332, 0
        %v445 = vsel %vm416, %v333, 0
        %v448 = vsel %vm416, %v334, 0
        %v451 = vsel %vm416, %v335, 0
        %v454 = vsel %vm416, %v336, 0
        %v457 = vsel %vm416, %v337, 0
        %v460 = vsel %vm416, %v338, 0
        %v463 = vsel %vm416, %v339, 0
        %v466 = vsel %vm416, %v340, 0
        %v469 = vsel %vm416, %v341, 0
        %v472 = vsel %vm416, %v342, 0
        %v475 = vsel %vm416, %v343, 0
        %v478 = vsel %vm416, %v344, 0
        %v481 = vsel %vm416, %v345, 0
        %v484 = vsel %vm416, %v346, 0
        %v487 = vsel %vm416, %v347, 0
        %v490 = vsel %vm416, %v348, 0
        %v493 = vsel %vm416, %v349, 0
        %v496 = vsel %vm416, %v350, 0
        %v499 = vsel %vm416, %v351, 0
        %v502 = vsel %vm416, %v352, 0
        %v505 = vsel %vm416, %v353, 0
        %v508 = vsel %vm416, %v354, 0
        %v511 = vsel %vm416, %v355, 0
        %v514 = vsel %vm416, %v356, 0
        %v517 = vsel %vm416, %v357, 0
        %v520 = vsel %vm416, %v358, 0
        %v523 = vsel %vm416, %v359, 0
        %v526 = vsel %vm416, %v360, 0
        %v529 = vsel %vm416, %v361, 0
        %v532 = vsel %vm416, %v362, 0
        %v535 = vsel %vm416, %v363, 0
        %v538 = vsel %vm416, %v364, 0
        %v541 = vsel %vm416, %v365, 0
        %v544 = vsel %vm416, %v366, 0
        %v547 = vsel %vm416, %v367, 0
        %v550 = vsel %vm416, %v368, 0
        %v553 = vsel %vm416, %v369, 0
        %v556 = vsel %vm416, %v370, 0
        %v559 = vsel %vm416, %v371, 0
        %v562 = vsel %vm416, %v372, 0
        %v565 = vsel %vm416, %v373, 0
        %v568 = vsel %vm416, %v374, 0
        %v571 = vsel %vm416, %v375, 0
        %v574 = vsel %vm416, %v376, 0
        %v577 = vsel %vm416, %v377, 0
        %v580 = vsel %vm416, %v378, 0
        %v583 = vsel %vm416, %v379, 0
        %v586 = vsel %vm416, %v380, 0
        %v589 = vsel %vm416, %v381, 0
        %v592 = vsel %vm416, %v382, 0
        %v595 = vsel %vm416, %v383, 0
        %v598 = vsel %vm416, %v384, 0
        %v601 = vsel %vm416, %v385, 0
        %v604 = vsel %vm416, %v386, 0
        %v607 = vsel %vm416, %v387, 0
        %v610 = vsel %vm416, %v388, 0
        %v613 = vsel %vm416, %v389, 0
        %v616 = vsel %vm416, %v390, 0
        %v619 = vsel %vm416, %v391, 0
        %621 = vmatpush.xpose.msra.mxu0 %v475
        %622 = vmatpush.xpose.msra.mxu0 %v472
        %623 = vmatpush.xpose.msra.mxu0 %v469
        %624 = vmatpush.xpose.msra.mxu0 %v466
        %625 = vmatpush.xpose.msra.mxu0 %v463
        %626 = vmatpush.xpose.msra.mxu0 %v460
        %627 = vmatpush.xpose.msra.mxu0 %v457
        %628 = vmatpush.xpose.msra.mxu0 %v454
        %629 = vmatpush.xpose.msra.mxu0 %v451
        %630 = vmatpush.xpose.msra.mxu0 %v448
        %631 = vmatpush.xpose.msra.mxu0 %v445
        %632 = vmatpush.xpose.msra.mxu0 %v442
        %633 = vmatpush.xpose.msra.mxu0 %v439
        %634 = vmatpush.xpose.msra.mxu0 %v436
        %635 = vmatpush.xpose.msra.mxu0 %v433
        %636 = vmatpush.xpose.msra.mxu0 %v430
        %637 = vmatmul.f32.gmra.mxu0 %v418
        %v638 = vpop.f32.mrf.mxu0
        %v639 = vadd.f32 %v399, %v638
        %640 = vmatmul.f32.gmra.mxu0 %v421
        %v641 = vpop.f32.mrf.mxu0
        %v642 = vadd.f32 %v404, %v641
        %643 = vmatmul.f32.gmra.mxu0 %v424
        %v644 = vpop.f32.mrf.mxu0
        %v645 = vadd.f32 %v409, %v644
        %646 = vmatmul.f32.gmra.mxu0 %v427
        %v647 = vpop.f32.mrf.mxu0
        %v648 = vadd.f32 %v414, %v647
        %649 = vdwg.mxu0
        %650 = vmatpush.xpose.msra.mxu0 %v523
        %651 = vmatpush.xpose.msra.mxu0 %v520
        %652 = vmatpush.xpose.msra.mxu0 %v517
        %653 = vmatpush.xpose.msra.mxu0 %v514
        %654 = vmatpush.xpose.msra.mxu0 %v511
        %655 = vmatpush.xpose.msra.mxu0 %v508
        %656 = vmatpush.xpose.msra.mxu0 %v505
        %657 = vmatpush.xpose.msra.mxu0 %v502
        %658 = vmatpush.xpose.msra.mxu0 %v499
        %659 = vmatpush.xpose.msra.mxu0 %v496
        %660 = vmatpush.xpose.msra.mxu0 %v493
        %661 = vmatpush.xpose.msra.mxu0 %v490
        %662 = vmatpush.xpose.msra.mxu0 %v487
        %663 = vmatpush.xpose.msra.mxu0 %v484
        %664 = vmatpush.xpose.msra.mxu0 %v481
        %665 = vmatpush.xpose.msra.mxu0 %v478
        %666 = vmatmul.f32.gmra.mxu0 %v418
        %v667 = vpop.f32.mrf.mxu0
        %v668 = vadd.f32 %v399, %v667
        %669 = vmatmul.f32.gmra.mxu0 %v421
        %v670 = vpop.f32.mrf.mxu0
        %v671 = vadd.f32 %v404, %v670
        %672 = vmatmul.f32.gmra.mxu0 %v424
        %v673 = vpop.f32.mrf.mxu0
        %v674 = vadd.f32 %v409, %v673
        %675 = vmatmul.f32.gmra.mxu0 %v427
        %v676 = vpop.f32.mrf.mxu0
        %v677 = vadd.f32 %v414, %v676
        %678 = vdwg.mxu0
        %679 = vmatpush.xpose.msra.mxu0 %v571
        %680 = vmatpush.xpose.msra.mxu0 %v568
        %681 = vmatpush.xpose.msra.mxu0 %v565
        %682 = vmatpush.xpose.msra.mxu0 %v562
        %683 = vmatpush.xpose.msra.mxu0 %v559
        %684 = vmatpush.xpose.msra.mxu0 %v556
        %685 = vmatpush.xpose.msra.mxu0 %v553
        %686 = vmatpush.xpose.msra.mxu0 %v550
        %687 = vmatpush.xpose.msra.mxu0 %v547
        %688 = vmatpush.xpose.msra.mxu0 %v544
        %689 = vmatpush.xpose.msra.mxu0 %v541
        %690 = vmatpush.xpose.msra.mxu0 %v538
        %691 = vmatpush.xpose.msra.mxu0 %v535
        %692 = vmatpush.xpose.msra.mxu0 %v532
        %693 = vmatpush.xpose.msra.mxu0 %v529
        %694 = vmatpush.xpose.msra.mxu0 %v526
        %695 = vmatmul.f32.gmra.mxu0 %v418
        %v696 = vpop.f32.mrf.mxu0
        %v697 = vadd.f32 %v399, %v696
        %698 = vmatmul.f32.gmra.mxu0 %v421
        %v699 = vpop.f32.mrf.mxu0
        %v700 = vadd.f32 %v404, %v699
        %701 = vmatmul.f32.gmra.mxu0 %v424
        %v702 = vpop.f32.mrf.mxu0
        %v703 = vadd.f32 %v409, %v702
        %704 = vmatmul.f32.gmra.mxu0 %v427
        %v705 = vpop.f32.mrf.mxu0
        %v706 = vadd.f32 %v414, %v705
        %707 = vdwg.mxu0
        %708 = vmatpush.xpose.msra.mxu0 %v619
        %709 = vmatpush.xpose.msra.mxu0 %v616
        %710 = vmatpush.xpose.msra.mxu0 %v613
        %711 = vmatpush.xpose.msra.mxu0 %v610
        %712 = vmatpush.xpose.msra.mxu0 %v607
        %713 = vmatpush.xpose.msra.mxu0 %v604
        %714 = vmatpush.xpose.msra.mxu0 %v601
        %715 = vmatpush.xpose.msra.mxu0 %v598
        %716 = vmatpush.xpose.msra.mxu0 %v595
        %717 = vmatpush.xpose.msra.mxu0 %v592
        %718 = vmatpush.xpose.msra.mxu0 %v589
        %719 = vmatpush.xpose.msra.mxu0 %v586
        %720 = vmatpush.xpose.msra.mxu0 %v583
        %721 = vmatpush.xpose.msra.mxu0 %v580
        %722 = vmatpush.xpose.msra.mxu0 %v577
        %723 = vmatpush.xpose.msra.mxu0 %v574
        %724 = vmatmul.f32.gmra.mxu0 %v418
        %v725 = vpop.f32.mrf.mxu0
        %v726 = vadd.f32 %v399, %v725
        %727 = vmatmul.f32.gmra.mxu0 %v421
        %v728 = vpop.f32.mrf.mxu0
        %v729 = vadd.f32 %v404, %v728
        %730 = vmatmul.f32.gmra.mxu0 %v424
        %v731 = vpop.f32.mrf.mxu0
        %v732 = vadd.f32 %v409, %v731
        %733 = vmatmul.f32.gmra.mxu0 %v427
        %v734 = vpop.f32.mrf.mxu0
        %v735 = vadd.f32 %v414, %v734
        %736 = vdwg.mxu0
        %v737 = vld [vmem:[%s4] sm:$0xff]
        %v738 = vld [vmem:[%s4 + $0x8] sm:$0xff]
        %v739 = vld [vmem:[%s4 + $0x10] sm:$0xff]
        %v740 = vld [vmem:[%s4 + $0x18] sm:$0xff]
        %v741 = vld [vmem:[%s6] sm:$0xff]
        %v742 = vld [vmem:[%s7] sm:$0xff]
        %v744 = vsel %vm416, %v737, 0
        %v747 = vsel %vm416, %v738, 0
        %v750 = vsel %vm416, %v739, 0
        %v753 = vsel %vm416, %v740, 0
        %755 = vmatpush.msra.mxu0 0.0
        %756 = vmatpush.msra.mxu0 0.0
        %757 = vmatpush.msra.mxu0 0.0
        %758 = vmatpush.msra.mxu0 0.0
        %759 = vmatpush.msra.mxu0 0.0
        %760 = vmatpush.msra.mxu0 0.0
        %761 = vmatpush.msra.mxu0 0.0
        %762 = vmatpush.msra.mxu0 0.0
        %763 = vmatpush.msra.mxu0 0.0
        %764 = vmatpush.msra.mxu0 0.0
        %765 = vmatpush.msra.mxu0 0.0
        %766 = vmatpush.msra.mxu0 0.0
        %767 = vmatpush.msra.mxu0 0.0
        %768 = vmatpush.msra.mxu0 0.0
        %769 = vmatpush.msra.mxu0 0.0
        %770 = vmatpush.msra.mxu0 0.0
        %771 = vmatmul.f32.gmra.mxu0 %v744
        %v772 = vpop.f32.mrf.mxu0
        %v773 = vadd.f32 0.0, %v772
        %774 = vmatmul.f32.gmra.mxu0 %v747
        %v775 = vpop.f32.mrf.mxu0
        %v776 = vadd.f32 0.0, %v775
        %777 = vmatmul.f32.gmra.mxu0 %v750
        %v778 = vpop.f32.mrf.mxu0
        %v779 = vadd.f32 0.0, %v778
        %780 = vmatmul.f32.gmra.mxu0 %v753
        %v781 = vpop.f32.mrf.mxu0
        %v782 = vadd.f32 0.0, %v781
        %783 = vdwg.mxu0
        %v784 = vadd.f32 %v639, %v773
        %v785 = vadd.f32 %v668, %v773
        %v786 = vadd.f32 %v697, %v773
        %v787 = vadd.f32 %v726, %v773
        %v788 = vadd.f32 %v642, %v776
        %v789 = vadd.f32 %v671, %v776
        %v790 = vadd.f32 %v700, %v776
        %v791 = vadd.f32 %v729, %v776
        %v792 = vadd.f32 %v645, %v779
        %v793 = vadd.f32 %v674, %v779
        %v794 = vadd.f32 %v703, %v779
        %v795 = vadd.f32 %v732, %v779
        %v796 = vadd.f32 %v648, %v782
        %v797 = vadd.f32 %v677, %v782
        %v798 = vadd.f32 %v706, %v782
        %v799 = vadd.f32 %v735, %v782
        %v800 = vtanh.pop %v784
        %v801 = vtanh.pop %v785
        %v802 = vtanh.pop %v786
        %v803 = vtanh.pop %v787
        %v804 = vtanh.pop %v788
        %v805 = vtanh.pop %v789
        %v806 = vtanh.pop %v790
        %v807 = vtanh.pop %v791
        %v808 = vtanh.pop %v792
        %v809 = vtanh.pop %v793
        %v810 = vtanh.pop %v794
        %v811 = vtanh.pop %v795
        %v812 = vtanh.pop %v796
        %v813 = vtanh.pop %v797
        %v814 = vtanh.pop %v798
        %v815 = vtanh.pop %v799
        %817 = vset.pattern.permute.xlu0 0
        %818 = vperm.xlu0 %817, %v742
        %v819 = vpop.permute.xlu0 %818
        %vm821 = vcmask 261120
        %v823 = vsel %vm821, %v741, 0
        %825 = vmatpush.msra.mxu0 0.0
        %826 = vmatpush.msra.mxu0 0.0
        %827 = vmatpush.msra.mxu0 0.0
        %828 = vmatpush.msra.mxu0 0.0
        %829 = vmatpush.msra.mxu0 0.0
        %830 = vmatpush.msra.mxu0 0.0
        %831 = vmatpush.msra.mxu0 0.0
        %832 = vmatpush.msra.mxu0 0.0
        %833 = vmatpush.msra.mxu0 0.0
        %834 = vmatpush.msra.mxu0 0.0
        %835 = vmatpush.msra.mxu0 0.0
        %836 = vmatpush.msra.mxu0 0.0
        %837 = vmatpush.msra.mxu0 %v812
        %838 = vmatpush.msra.mxu0 %v808
        %839 = vmatpush.msra.mxu0 %v804
        %840 = vmatpush.msra.mxu0 %v800
        %841 = vmatmul.f32.gmra.mxu0 %v823
        %v842 = vpop.f32.mrf.mxu0
        %v843 = vadd.f32 %v819, %v842
        %844 = vdwg.mxu0
        %845 = vmatpush.msra.mxu0 0.0
        %846 = vmatpush.msra.mxu0 0.0
        %847 = vmatpush.msra.mxu0 0.0
        %848 = vmatpush.msra.mxu0 0.0
        %849 = vmatpush.msra.mxu0 0.0
        %850 = vmatpush.msra.mxu0 0.0
        %851 = vmatpush.msra.mxu0 0.0
        %852 = vmatpush.msra.mxu0 0.0
        %853 = vmatpush.msra.mxu0 0.0
        %854 = vmatpush.msra.mxu0 0.0
        %855 = vmatpush.msra.mxu0 0.0
        %856 = vmatpush.msra.mxu0 0.0
        %857 = vmatpush.msra.mxu0 %v813
        %858 = vmatpush.msra.mxu0 %v809
        %859 = vmatpush.msra.mxu0 %v805
        %860 = vmatpush.msra.mxu0 %v801
        %861 = vmatmul.f32.gmra.mxu0 %v823
        %v862 = vpop.f32.mrf.mxu0
        %v863 = vadd.f32 %v819, %v862
        %864 = vdwg.mxu0
        %865 = vmatpush.msra.mxu0 0.0
        %866 = vmatpush.msra.mxu0 0.0
        %867 = vmatpush.msra.mxu0 0.0
        %868 = vmatpush.msra.mxu0 0.0
        %869 = vmatpush.msra.mxu0 0.0
        %870 = vmatpush.msra.mxu0 0.0
        %871 = vmatpush.msra.mxu0 0.0
        %872 = vmatpush.msra.mxu0 0.0
        %873 = vmatpush.msra.mxu0 0.0
        %874 = vmatpush.msra.mxu0 0.0
        %875 = vmatpush.msra.mxu0 0.0
        %876 = vmatpush.msra.mxu0 0.0
        %877 = vmatpush.msra.mxu0 %v814
        %878 = vmatpush.msra.mxu0 %v810
        %879 = vmatpush.msra.mxu0 %v806
        %880 = vmatpush.msra.mxu0 %v802
        %881 = vmatmul.f32.gmra.mxu0 %v823
        %v882 = vpop.f32.mrf.mxu0
        %v883 = vadd.f32 %v819, %v882
        %884 = vdwg.mxu0
        %885 = vmatpush.msra.mxu0 0.0
        %886 = vmatpush.msra.mxu0 0.0
        %887 = vmatpush.msra.mxu0 0.0
        %888 = vmatpush.msra.mxu0 0.0
        %889 = vmatpush.msra.mxu0 0.0
        %890 = vmatpush.msra.mxu0 0.0
        %891 = vmatpush.msra.mxu0 0.0
        %892 = vmatpush.msra.mxu0 0.0
        %893 = vmatpush.msra.mxu0 0.0
        %894 = vmatpush.msra.mxu0 0.0
        %895 = vmatpush.msra.mxu0 0.0
        %896 = vmatpush.msra.mxu0 0.0
        %897 = vmatpush.msra.mxu0 %v815
        %898 = vmatpush.msra.mxu0 %v811
        %899 = vmatpush.msra.mxu0 %v807
        %900 = vmatpush.msra.mxu0 %v803
        %901 = vmatmul.f32.gmra.mxu0 %v823
        %v902 = vpop.f32.mrf.mxu0
        %v903 = vadd.f32 %v819, %v902
        %904 = vdwg.mxu0
        %v905 = vadd.f32 %v843, 0.0
        %v906 = vadd.f32 %v863, 0.0
        %v907 = vadd.f32 %v883, 0.0
        %v908 = vadd.f32 %v903, 0.0
        %v913 = vrot.slane %v905, 2
        %v914 = vrot.slane %v906, 2
        %v915 = vrot.slane %v907, 2
        %v916 = vrot.slane %v908, 2
        %v921 = vadd.f32 %v905, %v913
        %v922 = vadd.f32 %v906, %v914
        %v923 = vadd.f32 %v907, %v915
        %v924 = vadd.f32 %v908, %v916
        %vm925 = vcmask 1046532
        %v926 = vsel %vm925, %v905, -inf
        %v927 = vrot.slane %v926, 4
        %v928 = vmax.f32 %v926, %v927
        %v929 = vrot.slane %v928, 2
        %v930 = vmax.f32 %v928, %v929
        %v931 = vrot.slane %v930, 1
        %v932 = vmax.f32 %v930, %v931
        %v933 = vsel %vm925, %v906, -inf
        %v934 = vrot.slane %v933, 4
        %v935 = vmax.f32 %v933, %v934
        %v936 = vrot.slane %v935, 2
        %v937 = vmax.f32 %v935, %v936
        %v938 = vrot.slane %v937, 1
        %v939 = vmax.f32 %v937, %v938
        %v940 = vsel %vm925, %v907, -inf
        %v941 = vrot.slane %v940, 4
        %v942 = vmax.f32 %v940, %v941
        %v943 = vrot.slane %v942, 2
        %v944 = vmax.f32 %v942, %v943
        %v945 = vrot.slane %v944, 1
        %v946 = vmax.f32 %v944, %v945
        %v947 = vsel %vm925, %v908, -inf
        %v948 = vrot.slane %v947, 4
        %v949 = vmax.f32 %v947, %v948
        %v950 = vrot.slane %v949, 2
        %v951 = vmax.f32 %v949, %v950
        %v952 = vrot.slane %v951, 1
        %v953 = vmax.f32 %v951, %v952
        %v954 = vsub.f32 %v905, %v932
        %v955 = vsub.f32 %v906, %v939
        %v956 = vsub.f32 %v907, %v946
        %v957 = vsub.f32 %v908, %v953
        %v958 = vmul.f32 %v954, 1.442695
        %v959 = vpow.pop %v958
        %v960 = vmul.f32 %v955, 1.442695
        %v961 = vpow.pop %v960
        %v962 = vmul.f32 %v956, 1.442695
        %v963 = vpow.pop %v962
        %v964 = vmul.f32 %v957, 1.442695
        %v965 = vpow.pop %v964
        %v970 = vrot.slane %v959, 1
        %v971 = vrot.slane %v961, 1
        %v972 = vrot.slane %v963, 1
        %v973 = vrot.slane %v965, 1
        %v978 = vadd.f32 %v959, %v970
        %v979 = vadd.f32 %v961, %v971
        %v980 = vadd.f32 %v963, %v972
        %v981 = vadd.f32 %v965, %v973
        %v982 = vrot.slane %v959, 2
        %v983 = vrot.slane %v961, 2
        %v984 = vrot.slane %v963, 2
        %v985 = vrot.slane %v965, 2
        %v990 = vadd.f32 %v978, %v982
        %v991 = vadd.f32 %v979, %v983
        %v992 = vadd.f32 %v980, %v984
        %v993 = vadd.f32 %v981, %v985
        %v994 = vrcp.pop %v990
        %v995 = vrcp.pop %v991
        %v996 = vrcp.pop %v992
        %v997 = vrcp.pop %v993
        %v1002 = vrot.slane %v994, 7
        %v1003 = vrot.slane %v995, 7
        %v1004 = vrot.slane %v996, 7
        %v1005 = vrot.slane %v997, 7
        %v1010 = vmul.f32 %v959, %v1002
        %v1011 = vmul.f32 %v961, %v1003
        %v1012 = vmul.f32 %v963, %v1004
        %v1013 = vmul.f32 %v965, %v1005
        %v1014 = vstv %s319
        %vm1015 = vcmp.ge.f32.partialorder %v1010, %v1014
        %vm1016 = vcmp.ge.f32.partialorder %v1011, %v1014
        %vm1017 = vcmp.ge.f32.partialorder %v1012, %v1014
        %vm1018 = vcmp.ge.f32.partialorder %v1013, %v1014
        %v1019 = vsel %vm1015, 1, 0
        %v1020 = vsel %vm1016, 1, 0
        %v1021 = vsel %vm1017, 1, 0
        %v1022 = vsel %vm1018, 1, 0
        %v1023 = vcvt.s32.f32 %v1019
        %v1024 = vcvt.s32.f32 %v1020
        %v1025 = vcvt.s32.f32 %v1021
        %v1026 = vcvt.s32.f32 %v1022
        %v1027 = vperm.slane %v1023, 5
        %v1028 = vperm.slane %v1024, 5
        %v1029 = vperm.slane %v1025, 5
        %v1030 = vperm.slane %v1026, 5
        %v1031 = vmul.f32 %v1027, %v921
        %v1032 = vmul.f32 %v1028, %v922
        %v1033 = vmul.f32 %v1029, %v923
        %v1034 = vmul.f32 %v1030, %v924
        %v1035 = vsub.f32 1.0, %v1023
        %v1036 = vsub.f32 1.0, %v1024
        %v1037 = vsub.f32 1.0, %v1025
        %v1038 = vsub.f32 1.0, %v1026
        %v1039 = vperm.slane %v1035, 5
        %v1040 = vperm.slane %v1036, 5
        %v1041 = vperm.slane %v1037, 5
        %v1042 = vperm.slane %v1038, 5
        %v1043 = vmul.f32 %v1039, %v905
        %v1044 = vmul.f32 %v1040, %v906
        %v1045 = vmul.f32 %v1041, %v907
        %v1046 = vmul.f32 %v1042, %v908
        %v1047 = vadd.f32 %v1031, %v1043
        %v1048 = vadd.f32 %v1032, %v1044
        %v1049 = vadd.f32 %v1033, %v1045
        %v1050 = vadd.f32 %v1034, %v1046
        %v1052 = vperm.slane %v323, 0
        %v1053 = vperm.slane %v323, 1
        %v1054 = vperm.slane %v323, 2
        %v1055 = vperm.slane %v323, 3
        %v1060 = vmul.f32 %v1047, %v1052
        %v1061 = vmul.f32 %v1048, %v1053
        %v1062 = vmul.f32 %v1049, %v1054
        %v1063 = vmul.f32 %v1050, %v1055
        %v1064 = vmul.f32 %v1010, %v1052
        %v1065 = vmul.f32 %v1011, %v1053
        %v1066 = vmul.f32 %v1012, %v1054
        %v1067 = vmul.f32 %v1013, %v1055
        %v1072 = vrot.slane %v1064, 3
        %v1073 = vrot.slane %v1065, 3
        %v1074 = vrot.slane %v1066, 3
        %v1075 = vrot.slane %v1067, 3
        %vm1080 = vcmask 1041408
        %v1081 = vsel %vm1080, %v1060, %v1072
        %v1082 = vsel %vm1080, %v1061, %v1073
        %v1083 = vsel %vm1080, %v1062, %v1074
        %v1084 = vsel %vm1080, %v1063, %v1075
        %vm1085 = vcmask 1042432
        %v1086 = vsel %vm1085, %v1081, 0.0
        %v1087 = vsel %vm1085, %v1082, 0.0
        %v1088 = vsel %vm1085, %v1083, 0.0
        %v1089 = vsel %vm1085, %v1084, 0.0
        %1090 = vst [vmem:[%s308] sm:$0xff] %v1086
        %1091 = vst [vmem:[%s308 + $0x8] sm:$0xff] %v1087
        %1092 = vst [vmem:[%s308 + $0x10] sm:$0xff] %v1088
        %1093 = vst [vmem:[%s308 + $0x18] sm:$0xff] %v1089
        %1094 = vmatpush.msra.mxu0 0.0
        %1095 = vmatpush.msra.mxu0 0.0
        %1096 = vmatpush.msra.mxu0 0.0
        %1097 = vmatpush.msra.mxu0 0.0
        %1098 = vmatpush.msra.mxu0 0.0
        %1099 = vmatpush.msra.mxu0 0.0
        %1100 = vmatpush.msra.mxu0 0.0
        %1101 = vmatpush.msra.mxu0 0.0
        %1102 = vmatpush.msra.mxu0 0.0
        %1103 = vmatpush.msra.mxu0 0.0
        %1104 = vmatpush.msra.mxu0 0.0
        %1105 = vmatpush.msra.mxu0 0.0
        %1106 = vmatpush.msra.mxu0 0.0
        %1107 = vmatpush.msra.mxu0 0.0
        %1108 = vmatpush.msra.mxu0 0.0
        %1109 = vmatpush.msra.mxu0 %v905
        %1110 = vmatmul.f32.gmra.mxu0 %v744
        %v1111 = vpop.f32.mrf.mxu0
        %v1112 = vadd.f32 0.0, %v1111
        %1113 = vmatmul.f32.gmra.mxu0 %v747
        %v1114 = vpop.f32.mrf.mxu0
        %v1115 = vadd.f32 0.0, %v1114
        %1116 = vmatmul.f32.gmra.mxu0 %v750
        %v1117 = vpop.f32.mrf.mxu0
        %v1118 = vadd.f32 0.0, %v1117
        %1119 = vmatmul.f32.gmra.mxu0 %v753
        %v1120 = vpop.f32.mrf.mxu0
        %v1121 = vadd.f32 0.0, %v1120
        %1122 = vdwg.mxu0
        %1123 = vmatpush.msra.mxu0 0.0
        %1124 = vmatpush.msra.mxu0 0.0
        %1125 = vmatpush.msra.mxu0 0.0
        %1126 = vmatpush.msra.mxu0 0.0
        %1127 = vmatpush.msra.mxu0 0.0
        %1128 = vmatpush.msra.mxu0 0.0
        %1129 = vmatpush.msra.mxu0 0.0
        %1130 = vmatpush.msra.mxu0 0.0
        %1131 = vmatpush.msra.mxu0 0.0
        %1132 = vmatpush.msra.mxu0 0.0
        %1133 = vmatpush.msra.mxu0 0.0
        %1134 = vmatpush.msra.mxu0 0.0
        %1135 = vmatpush.msra.mxu0 0.0
        %1136 = vmatpush.msra.mxu0 0.0
        %1137 = vmatpush.msra.mxu0 0.0
        %1138 = vmatpush.msra.mxu0 %v906
        %1139 = vmatmul.f32.gmra.mxu0 %v744
        %v1140 = vpop.f32.mrf.mxu0
        %v1141 = vadd.f32 0.0, %v1140
        %1142 = vmatmul.f32.gmra.mxu0 %v747
        %v1143 = vpop.f32.mrf.mxu0
        %v1144 = vadd.f32 0.0, %v1143
        %1145 = vmatmul.f32.gmra.mxu0 %v750
        %v1146 = vpop.f32.mrf.mxu0
        %v1147 = vadd.f32 0.0, %v1146
        %1148 = vmatmul.f32.gmra.mxu0 %v753
        %v1149 = vpop.f32.mrf.mxu0
        %v1150 = vadd.f32 0.0, %v1149
        %1151 = vdwg.mxu0
        %1152 = vmatpush.msra.mxu0 0.0
        %1153 = vmatpush.msra.mxu0 0.0
        %1154 = vmatpush.msra.mxu0 0.0
        %1155 = vmatpush.msra.mxu0 0.0
        %1156 = vmatpush.msra.mxu0 0.0
        %1157 = vmatpush.msra.mxu0 0.0
        %1158 = vmatpush.msra.mxu0 0.0
        %1159 = vmatpush.msra.mxu0 0.0
        %1160 = vmatpush.msra.mxu0 0.0
        %1161 = vmatpush.msra.mxu0 0.0
        %1162 = vmatpush.msra.mxu0 0.0
        %1163 = vmatpush.msra.mxu0 0.0
        %1164 = vmatpush.msra.mxu0 0.0
        %1165 = vmatpush.msra.mxu0 0.0
        %1166 = vmatpush.msra.mxu0 0.0
        %1167 = vmatpush.msra.mxu0 %v907
        %1168 = vmatmul.f32.gmra.mxu0 %v744
        %v1169 = vpop.f32.mrf.mxu0
        %v1170 = vadd.f32 0.0, %v1169
        %1171 = vmatmul.f32.gmra.mxu0 %v747
        %v1172 = vpop.f32.mrf.mxu0
        %v1173 = vadd.f32 0.0, %v1172
        %1174 = vmatmul.f32.gmra.mxu0 %v750
        %v1175 = vpop.f32.mrf.mxu0
        %v1176 = vadd.f32 0.0, %v1175
        %1177 = vmatmul.f32.gmra.mxu0 %v753
        %v1178 = vpop.f32.mrf.mxu0
        %v1179 = vadd.f32 0.0, %v1178
        %1180 = vdwg.mxu0
        %1181 = vmatpush.msra.mxu0 0.0
        %1182 = vmatpush.msra.mxu0 0.0
        %1183 = vmatpush.msra.mxu0 0.0
        %1184 = vmatpush.msra.mxu0 0.0
        %1185 = vmatpush.msra.mxu0 0.0
        %1186 = vmatpush.msra.mxu0 0.0
        %1187 = vmatpush.msra.mxu0 0.0
        %1188 = vmatpush.msra.mxu0 0.0
        %1189 = vmatpush.msra.mxu0 0.0
        %1190 = vmatpush.msra.mxu0 0.0
        %1191 = vmatpush.msra.mxu0 0.0
        %1192 = vmatpush.msra.mxu0 0.0
        %1193 = vmatpush.msra.mxu0 0.0
        %1194 = vmatpush.msra.mxu0 0.0
        %1195 = vmatpush.msra.mxu0 0.0
        %1196 = vmatpush.msra.mxu0 %v908
        %1197 = vmatmul.f32.gmra.mxu0 %v744
        %v1198 = vpop.f32.mrf.mxu0
        %v1199 = vadd.f32 0.0, %v1198
        %1200 = vmatmul.f32.gmra.mxu0 %v747
        %v1201 = vpop.f32.mrf.mxu0
        %v1202 = vadd.f32 0.0, %v1201
        %1203 = vmatmul.f32.gmra.mxu0 %v750
        %v1204 = vpop.f32.mrf.mxu0
        %v1205 = vadd.f32 0.0, %v1204
        %1206 = vmatmul.f32.gmra.mxu0 %v753
        %v1207 = vpop.f32.mrf.mxu0
        %v1208 = vadd.f32 0.0, %v1207
        %1209 = vdwg.mxu0
        %v1210 = vadd.f32 %v639, %v1112
        %v1211 = vadd.f32 %v668, %v1141
        %v1212 = vadd.f32 %v697, %v1170
        %v1213 = vadd.f32 %v726, %v1199
        %v1214 = vadd.f32 %v642, %v1115
        %v1215 = vadd.f32 %v671, %v1144
        %v1216 = vadd.f32 %v700, %v1173
        %v1217 = vadd.f32 %v729, %v1202
        %v1218 = vadd.f32 %v645, %v1118
        %v1219 = vadd.f32 %v674, %v1147
        %v1220 = vadd.f32 %v703, %v1176
        %v1221 = vadd.f32 %v732, %v1205
        %v1222 = vadd.f32 %v648, %v1121
        %v1223 = vadd.f32 %v677, %v1150
        %v1224 = vadd.f32 %v706, %v1179
        %v1225 = vadd.f32 %v735, %v1208
        %v1226 = vtanh.pop %v1210
        %v1227 = vtanh.pop %v1211
        %v1228 = vtanh.pop %v1212
        %v1229 = vtanh.pop %v1213
        %v1230 = vtanh.pop %v1214
        %v1231 = vtanh.pop %v1215
        %v1232 = vtanh.pop %v1216
        %v1233 = vtanh.pop %v1217
        %v1234 = vtanh.pop %v1218
        %v1235 = vtanh.pop %v1219
        %v1236 = vtanh.pop %v1220
        %v1237 = vtanh.pop %v1221
        %v1238 = vtanh.pop %v1222
        %v1239 = vtanh.pop %v1223
        %v1240 = vtanh.pop %v1224
        %v1241 = vtanh.pop %v1225
        %1242 = vmatpush.msra.mxu0 0.0
        %1243 = vmatpush.msra.mxu0 0.0
        %1244 = vmatpush.msra.mxu0 0.0
        %1245 = vmatpush.msra.mxu0 0.0
        %1246 = vmatpush.msra.mxu0 0.0
        %1247 = vmatpush.msra.mxu0 0.0
        %1248 = vmatpush.msra.mxu0 0.0
        %1249 = vmatpush.msra.mxu0 0.0
        %1250 = vmatpush.msra.mxu0 0.0
        %1251 = vmatpush.msra.mxu0 0.0
        %1252 = vmatpush.msra.mxu0 0.0
        %1253 = vmatpush.msra.mxu0 0.0
        %1254 = vmatpush.msra.mxu0 %v1238
        %1255 = vmatpush.msra.mxu0 %v1234
        %1256 = vmatpush.msra.mxu0 %v1230
        %1257 = vmatpush.msra.mxu0 %v1226
        %1258 = vmatmul.f32.gmra.mxu0 %v823
        %v1259 = vpop.f32.mrf.mxu0
        %v1260 = vadd.f32 %v819, %v1259
        %1261 = vdwg.mxu0
        %1262 = vmatpush.msra.mxu0 0.0
        %1263 = vmatpush.msra.mxu0 0.0
        %1264 = vmatpush.msra.mxu0 0.0
        %1265 = vmatpush.msra.mxu0 0.0
        %1266 = vmatpush.msra.mxu0 0.0
        %1267 = vmatpush.msra.mxu0 0.0
        %1268 = vmatpush.msra.mxu0 0.0
        %1269 = vmatpush.msra.mxu0 0.0
        %1270 = vmatpush.msra.mxu0 0.0
        %1271 = vmatpush.msra.mxu0 0.0
        %1272 = vmatpush.msra.mxu0 0.0
        %1273 = vmatpush.msra.mxu0 0.0
        %1274 = vmatpush.msra.mxu0 %v1239
        %1275 = vmatpush.msra.mxu0 %v1235
        %1276 = vmatpush.msra.mxu0 %v1231
        %1277 = vmatpush.msra.mxu0 %v1227
        %1278 = vmatmul.f32.gmra.mxu0 %v823
        %v1279 = vpop.f32.mrf.mxu0
        %v1280 = vadd.f32 %v819, %v1279
        %1281 = vdwg.mxu0
        %1282 = vmatpush.msra.mxu0 0.0
        %1283 = vmatpush.msra.mxu0 0.0
        %1284 = vmatpush.msra.mxu0 0.0
        %1285 = vmatpush.msra.mxu0 0.0
        %1286 = vmatpush.msra.mxu0 0.0
        %1287 = vmatpush.msra.mxu0 0.0
        %1288 = vmatpush.msra.mxu0 0.0
        %1289 = vmatpush.msra.mxu0 0.0
        %1290 = vmatpush.msra.mxu0 0.0
        %1291 = vmatpush.msra.mxu0 0.0
        %1292 = vmatpush.msra.mxu0 0.0
        %1293 = vmatpush.msra.mxu0 0.0
        %1294 = vmatpush.msra.mxu0 %v1240
        %1295 = vmatpush.msra.mxu0 %v1236
        %1296 = vmatpush.msra.mxu0 %v1232
        %1297 = vmatpush.msra.mxu0 %v1228
        %1298 = vmatmul.f32.gmra.mxu0 %v823
        %v1299 = vpop.f32.mrf.mxu0
        %v1300 = vadd.f32 %v819, %v1299
        %1301 = vdwg.mxu0
        %1302 = vmatpush.msra.mxu0 0.0
        %1303 = vmatpush.msra.mxu0 0.0
        %1304 = vmatpush.msra.mxu0 0.0
        %1305 = vmatpush.msra.mxu0 0.0
        %1306 = vmatpush.msra.mxu0 0.0
        %1307 = vmatpush.msra.mxu0 0.0
        %1308 = vmatpush.msra.mxu0 0.0
        %1309 = vmatpush.msra.mxu0 0.0
        %1310 = vmatpush.msra.mxu0 0.0
        %1311 = vmatpush.msra.mxu0 0.0
        %1312 = vmatpush.msra.mxu0 0.0
        %1313 = vmatpush.msra.mxu0 0.0
        %1314 = vmatpush.msra.mxu0 %v1241
        %1315 = vmatpush.msra.mxu0 %v1237
        %1316 = vmatpush.msra.mxu0 %v1233
        %1317 = vmatpush.msra.mxu0 %v1229
        %1318 = vmatmul.f32.gmra.mxu0 %v823
        %v1319 = vpop.f32.mrf.mxu0
        %v1320 = vadd.f32 %v819, %v1319
        %1321 = vdwg.mxu0
        %v1322 = vadd.f32 %v1260, %v905
        %v1323 = vadd.f32 %v1280, %v906
        %v1324 = vadd.f32 %v1300, %v907
        %v1325 = vadd.f32 %v1320, %v908
        %v1330 = vrot.slane %v1322, 2
        %v1331 = vrot.slane %v1323, 2
        %v1332 = vrot.slane %v1324, 2
        %v1333 = vrot.slane %v1325, 2
        %v1338 = vadd.f32 %v1322, %v1330
        %v1339 = vadd.f32 %v1323, %v1331
        %v1340 = vadd.f32 %v1324, %v1332
        %v1341 = vadd.f32 %v1325, %v1333
        %v1342 = vsel %vm925, %v1322, -inf
        %v1343 = vrot.slane %v1342, 4
        %v1344 = vmax.f32 %v1342, %v1343
        %v1345 = vrot.slane %v1344, 2
        %v1346 = vmax.f32 %v1344, %v1345
        %v1347 = vrot.slane %v1346, 1
        %v1348 = vmax.f32 %v1346, %v1347
        %v1349 = vsel %vm925, %v1323, -inf
        %v1350 = vrot.slane %v1349, 4
        %v1351 = vmax.f32 %v1349, %v1350
        %v1352 = vrot.slane %v1351, 2
        %v1353 = vmax.f32 %v1351, %v1352
        %v1354 = vrot.slane %v1353, 1
        %v1355 = vmax.f32 %v1353, %v1354
        %v1356 = vsel %vm925, %v1324, -inf
        %v1357 = vrot.slane %v1356, 4
        %v1358 = vmax.f32 %v1356, %v1357
        %v1359 = vrot.slane %v1358, 2
        %v1360 = vmax.f32 %v1358, %v1359
        %v1361 = vrot.slane %v1360, 1
        %v1362 = vmax.f32 %v1360, %v1361
        %v1363 = vsel %vm925, %v1325, -inf
        %v1364 = vrot.slane %v1363, 4
        %v1365 = vmax.f32 %v1363, %v1364
        %v1366 = vrot.slane %v1365, 2
        %v1367 = vmax.f32 %v1365, %v1366
        %v1368 = vrot.slane %v1367, 1
        %v1369 = vmax.f32 %v1367, %v1368
        %v1370 = vsub.f32 %v1322, %v1348
        %v1371 = vsub.f32 %v1323, %v1355
        %v1372 = vsub.f32 %v1324, %v1362
        %v1373 = vsub.f32 %v1325, %v1369
        %v1374 = vmul.f32 %v1370, 1.442695
        %v1375 = vpow.pop %v1374
        %v1376 = vmul.f32 %v1371, 1.442695
        %v1377 = vpow.pop %v1376
        %v1378 = vmul.f32 %v1372, 1.442695
        %v1379 = vpow.pop %v1378
        %v1380 = vmul.f32 %v1373, 1.442695
        %v1381 = vpow.pop %v1380
        %v1386 = vrot.slane %v1375, 1
        %v1387 = vrot.slane %v1377, 1
        %v1388 = vrot.slane %v1379, 1
        %v1389 = vrot.slane %v1381, 1
        %v1394 = vadd.f32 %v1375, %v1386
        %v1395 = vadd.f32 %v1377, %v1387
        %v1396 = vadd.f32 %v1379, %v1388
        %v1397 = vadd.f32 %v1381, %v1389
        %v1398 = vrot.slane %v1375, 2
        %v1399 = vrot.slane %v1377, 2
        %v1400 = vrot.slane %v1379, 2
        %v1401 = vrot.slane %v1381, 2
        %v1406 = vadd.f32 %v1394, %v1398
        %v1407 = vadd.f32 %v1395, %v1399
        %v1408 = vadd.f32 %v1396, %v1400
        %v1409 = vadd.f32 %v1397, %v1401
        %v1410 = vrcp.pop %v1406
        %v1411 = vrcp.pop %v1407
        %v1412 = vrcp.pop %v1408
        %v1413 = vrcp.pop %v1409
        %v1418 = vrot.slane %v1410, 7
        %v1419 = vrot.slane %v1411, 7
        %v1420 = vrot.slane %v1412, 7
        %v1421 = vrot.slane %v1413, 7
        %v1426 = vmul.f32 %v1375, %v1418
        %v1427 = vmul.f32 %v1377, %v1419
        %v1428 = vmul.f32 %v1379, %v1420
        %v1429 = vmul.f32 %v1381, %v1421
        %vm1430 = vcmp.ge.f32.partialorder %v1426, %v1014
        %vm1431 = vcmp.ge.f32.partialorder %v1427, %v1014
        %vm1432 = vcmp.ge.f32.partialorder %v1428, %v1014
        %vm1433 = vcmp.ge.f32.partialorder %v1429, %v1014
        %v1434 = vsel %vm1430, 1, 0
        %v1435 = vsel %vm1431, 1, 0
        %v1436 = vsel %vm1432, 1, 0
        %v1437 = vsel %vm1433, 1, 0
        %v1438 = vcvt.s32.f32 %v1434
        %v1439 = vcvt.s32.f32 %v1435
        %v1440 = vcvt.s32.f32 %v1436
        %v1441 = vcvt.s32.f32 %v1437
        %v1442 = vperm.slane %v1438, 5
        %v1443 = vperm.slane %v1439, 5
        %v1444 = vperm.slane %v1440, 5
        %v1445 = vperm.slane %v1441, 5
        %v1446 = vmul.f32 %v1442, %v1338
        %v1447 = vmul.f32 %v1443, %v1339
        %v1448 = vmul.f32 %v1444, %v1340
        %v1449 = vmul.f32 %v1445, %v1341
        %v1450 = vsub.f32 1.0, %v1438
        %v1451 = vsub.f32 1.0, %v1439
        %v1452 = vsub.f32 1.0, %v1440
        %v1453 = vsub.f32 1.0, %v1441
        %v1454 = vperm.slane %v1450, 5
        %v1455 = vperm.slane %v1451, 5
        %v1456 = vperm.slane %v1452, 5
        %v1457 = vperm.slane %v1453, 5
        %v1458 = vmul.f32 %v1454, %v1322
        %v1459 = vmul.f32 %v1455, %v1323
        %v1460 = vmul.f32 %v1456, %v1324
        %v1461 = vmul.f32 %v1457, %v1325
        %v1462 = vadd.f32 %v1446, %v1458
        %v1463 = vadd.f32 %v1447, %v1459
        %v1464 = vadd.f32 %v1448, %v1460
        %v1465 = vadd.f32 %v1449, %v1461
        %v1466 = vmul.f32 %v1462, %v1052
        %v1467 = vmul.f32 %v1463, %v1053
        %v1468 = vmul.f32 %v1464, %v1054
        %v1469 = vmul.f32 %v1465, %v1055
        %v1470 = vmul.f32 %v1426, %v1052
        %v1471 = vmul.f32 %v1427, %v1053
        %v1472 = vmul.f32 %v1428, %v1054
        %v1473 = vmul.f32 %v1429, %v1055
        %v1478 = vrot.slane %v1470, 3
        %v1479 = vrot.slane %v1471, 3
        %v1480 = vrot.slane %v1472, 3
        %v1481 = vrot.slane %v1473, 3
        %v1486 = vsel %vm1080, %v1466, %v1478
        %v1487 = vsel %vm1080, %v1467, %v1479
        %v1488 = vsel %vm1080, %v1468, %v1480
        %v1489 = vsel %vm1080, %v1469, %v1481
        %v1490 = vsel %vm1085, %v1486, 0.0
        %v1491 = vsel %vm1085, %v1487, 0.0
        %v1492 = vsel %vm1085, %v1488, 0.0
        %v1493 = vsel %vm1085, %v1489, 0.0
        %s1494 = scalar_lea.vmem %s308, 32 [#allocation3]
        %1495 = vst [vmem:[%s1494] sm:$0xff] %v1490
        %1496 = vst [vmem:[%s1494 + $0x8] sm:$0xff] %v1491
        %1497 = vst [vmem:[%s1494 + $0x10] sm:$0xff] %v1492
        %1498 = vst [vmem:[%s1494 + $0x18] sm:$0xff] %v1493
        %s1499 = sand.u32 %s206, 1
        %s1500 = sand.u32 %s206, 1
        %s1501 = smul.addr %s1500, 64
        %s1502 = scalar_lea.vmem [#allocation3], %s1501
        // Predicated region
        $region53: #{_slim_forward.1} parent=51 // pred_check
          %p1503 = pneg %p216
        $region54: #{_slim_forward.1} parent=51 // pred_check_branch
          %1505 = sbr.rel (%p1503) target = $region56
        $region55: #{_slim_forward.1} parent=51 // pred_region
          %s1506 = smul.u32 4, %s20
          %s1507 = smul.addr %s1506, 8
          %s1508 = scalar_lea.vmem %s8, %s1507
          // Predicated region
          $region57: #{_slim_forward.1} parent=55 // pred_check
            _
          $region58: #{_slim_forward.1} parent=55 // pred_check_branch
            %1510 = sbr.rel (0) target = $region60
          $region59: #{_slim_forward.1} parent=55 // pred_region
            // Predicated region
            $region61: #{_slim_forward.1} parent=59 // pred_check
              _
            $region62: #{_slim_forward.1} parent=59 // pred_check_branch
              %1512 = sbr.rel (0) target = $region64
            $region63: #{_slim_forward.1} parent=59 // pred_region
              loop: start=0, step=1, limit=1
              $region65: #{_slim_forward.1} parent=63 // loop_pre_header
                _
              $region66: #{_slim_forward.1} parent=63 // loop_header
                %s1514 = sphi 0, %s1518
                %p1515 = scmp.ge.s32.totalorder %s1514, 1
                %s1519 = sphi %s1502, %s1502
                %s1520 = sphi %s1508, %s1508
              $region67: #{_slim_forward.1} parent=63 // loop_header_branch
                %1517 = sbr.rel (%p1515) target = $region71
              $region68: #{_slim_forward.1} parent=63 // loop_body
                %v1521 = vld [vmem:[%s1519] sm:$0xff]
                %1522 = vst [vmem:[%s1520] sm:$0xff] %v1521
                %v1523 = vld [vmem:[%s1519 + $0x8] sm:$0xff]
                %1524 = vst [vmem:[%s1520 + $0x8] sm:$0xff] %v1523
                %v1525 = vld [vmem:[%s1519 + $0x10] sm:$0xff]
                %1526 = vst [vmem:[%s1520 + $0x10] sm:$0xff] %v1525
                %v1527 = vld [vmem:[%s1519 + $0x18] sm:$0xff]
                %1528 = vst [vmem:[%s1520 + $0x18] sm:$0xff] %v1527
                %v1529 = vld [vmem:[%s1519 + $0x20] sm:$0xff]
                %1530 = vst [vmem:[%s1520 + $0x40] sm:$0xff] %v1529
                %v1531 = vld [vmem:[%s1519 + $0x28] sm:$0xff]
                %1532 = vst [vmem:[%s1520 + $0x48] sm:$0xff] %v1531
                %v1533 = vld [vmem:[%s1519 + $0x30] sm:$0xff]
                %1534 = vst [vmem:[%s1520 + $0x50] sm:$0xff] %v1533
                %v1535 = vld [vmem:[%s1519 + $0x38] sm:$0xff]
                %1536 = vst [vmem:[%s1520 + $0x58] sm:$0xff] %v1535
              $region69: #{_slim_forward.1} parent=63 // loop_footer
                %s1518 = sadd.s32 1, %s1514
              $region70: #{_slim_forward.1} parent=63 // loop_footer_branch
                %1513 = sbr.rel target = $region66
              $region71: #{_slim_forward.1} parent=63 // loop_exit
                _
            $region64: #{_slim_forward.1} parent=59 // pred_fallthru
              _
            // Predicated region
            $region72: #{_slim_forward.1} parent=59 // pred_check
              _
            $region73: #{_slim_forward.1} parent=59 // pred_check_branch
              %1538 = sbr.rel target = $region75
            $region74: #{_slim_forward.1} parent=59 // pred_region
              _
            $region75: #{_slim_forward.1} parent=59 // pred_fallthru
              _
          $region60: #{_slim_forward.1} parent=55 // pred_fallthru
            _
          %1539 = vnop
        $region56: #{_slim_forward.1} parent=51 // pred_fallthru
          _
      $region52: #{_slim_forward.1} parent=5 // pred_fallthru
        _
      %p1540 = scmp.le.s32.totalorder 2, %s15
      // Predicated region
      $region76: #{_slim_forward.1} parent=5 // pred_check
        %p1541 = pneg %p1540
      $region77: #{_slim_forward.1} parent=5 // pred_check_branch
        %1543 = sbr.rel (%p1541) target = $region79
      $region78: #{_slim_forward.1} parent=5 // pred_region
        %s1544 = ssub.s32 %s15, 2
        // Predicated region
        $region80: #{_slim_forward.1} parent=78 // pred_check
          %p1545 = pneg %p222
        $region81: #{_slim_forward.1} parent=78 // pred_check_branch
          %1547 = sbr.rel (%p1545) target = $region83
        $region82: #{_slim_forward.1} parent=78 // pred_region
          %s1548 = sand.u32 %s207, 1
          %s1549 = sand.u32 %s207, 1
          %s1550 = smul.addr %s1549, 64
          %s1551 = scalar_lea.vmem [#allocation3], %s1550
        $region83: #{_slim_forward.1} parent=78 // pred_fallthru
          _
      $region79: #{_slim_forward.1} parent=5 // pred_fallthru
        _
    $region6: #{_slim_forward.1} parent=1 // loop_footer
      %s19 = sadd.s32 1, %s15
    $region7: #{_slim_forward.1} parent=1 // loop_footer_branch
      %14 = sbr.rel target = $region3
    $region8: #{_slim_forward.1} parent=1 // loop_exit
      _

</llo_original>
